<compile_context>
chip_gen: v7x
topology: tpu7x:2x2x1
jax: 0.10.0
libtpu: 0.0.40
codegen_flags: <defaults>
</compile_context>

<pallas_src>
import functools

import jax
import jax.numpy as jnp
from jax import lax
from jax.experimental import pallas as pl
from jax.experimental.pallas import tpu as pltpu


def _single_head_kernel(packed_ref, edges_ref, w_attn_ref, w_fused_ref, b_ref, out_ref,
                        *, min_score, c_in, k_prev):
    Gb, N, _ = packed_ref.shape
    E = edges_ref.shape[1]
    W_pad = out_ref.shape[2]

    packed = packed_ref[...]                                   # (Gb, N, C_in + K)  f32
    x = packed[:, :, :c_in]                                    # (Gb, N, C_in)
    prev = packed[:, :, c_in:]                                 # (Gb, N, K)
    w_attn = w_attn_ref[...]                                   # (1, C_in)

    # ---- TopKPooling (min_score branch): per-graph softmax over nodes ----
    s = jnp.sum(x * w_attn, axis=-1, keepdims=True)            # (Gb, N, 1)
    m = jnp.max(s, axis=1, keepdims=True)
    p = jnp.exp(s - m)
    score = p / jnp.sum(p, axis=1, keepdims=True)              # (Gb, N, 1)
    thr = jnp.minimum(jnp.max(score, axis=1, keepdims=True) - 1e-7,
                      jnp.float32(min_score))                  # (Gb, 1, 1)
    keep = (score > thr).astype(jnp.float32)                   # (Gb, N, 1)
    xp = x * score * keep                                      # (Gb, N, C_in)

    # ---- flatten the graph batch: one big block-diagonal gather/scatter ----
    xp_flat = xp.reshape(Gb * N, c_in)                         # (Gb*N, C_in)
    keep_flat = keep.reshape(Gb * N, 1)                        # (Gb*N, 1)

    edges = edges_ref[...]                                     # (Gb, E, 2) int32
    g_off = lax.broadcasted_iota(jnp.int32, (Gb, E, 1), 0) * N
    src = edges[:, :, 0:1] + g_off                             # (Gb, E, 1) global node id
    dst = edges[:, :, 1:2] + g_off

    col = lax.broadcasted_iota(jnp.int32, (Gb, E, Gb * N), 2)
    # One-hots are exact in bf16 -> full-throughput bf16 MXU path (f32 accumulation).
    src_1h = (src == col).astype(jnp.bfloat16).reshape(Gb * E, Gb * N)
    dst_1h = (dst == col).astype(jnp.bfloat16).reshape(Gb * E, Gb * N)

    # gathered[e] = x_pool[src[e]]
    gathered = jnp.dot(src_1h, xp_flat.astype(jnp.bfloat16),
                       preferred_element_type=jnp.float32)     # (Gb*E, C_in)
    # agg[n] = sum_{e : dst[e]==n} gathered[e]   (contract over edges)
    agg = lax.dot_general(dst_1h, gathered.astype(jnp.bfloat16),
                          (((0,), (0,)), ((), ())),
                          preferred_element_type=jnp.float32)  # (Gb*N, C_in)

    # ---- fused GraphConv projection straight into the padded 128-lane output slab ----
    # w_fused = [[w_rel], [w_root]] padded with K leading + (W_pad-K-C_out) trailing zero lanes.
    cat = jnp.concatenate([agg, xp_flat], axis=-1)             # (Gb*N, 2*C_in)
    conv = jnp.dot(cat, w_fused_ref[...],
                   preferred_element_type=jnp.float32) + b_ref[...]   # (Gb*N, W_pad)
    conv = jnp.where(conv > 0, conv, 0.01 * conv)              # leaky_relu(0.01)
    conv = conv * keep_flat                                    # scatter-back: zero dropped rows

    out_ref[...] = conv.reshape(Gb, N, W_pad).astype(out_ref.dtype)  # lane-dense full store
    out_ref[:, :, :k_prev] = prev.astype(out_ref.dtype)              # place new_x_prev lanes


def _choose_graphs_per_block(G, N, target_rows=256):
    """Largest divisor of G with Gb*N <= target_rows, preferring >=2 grid steps (megacore)."""
    divisors = [d for d in range(1, G + 1) if G % d == 0]
    fitting = [d for d in divisors if d * N <= target_rows] or [1]
    gb = max(fitting)
    if G // gb < 2:
        two_step = [d for d in fitting if G // d >= 2]
        if two_step:
            gb = max(two_step)
    return gb


def single_head_forward_batched(x, edge_index, new_x_prev, params, *, min_score=0.7,
                                graphs_per_block=None):
    """x: (G, N, C_in) f32; edge_index: (G, 2, E) int; new_x_prev: (G, N, K) f32.

    Returns (G, N, K + C_out) == concat([new_x_prev, new_x], axis=-1) per graph.
    """
    G, N, C_in = x.shape
    E = edge_index.shape[-1]
    K = new_x_prev.shape[-1]
    C_out = params["w_rel"].shape[1]
    W = K + C_out
    W_pad = ((W + 127) // 128) * 128                    # lane-dense output slab width

    Gb = graphs_per_block or _choose_graphs_per_block(G, N)
    assert G % Gb == 0, (G, Gb)

    # One node-feature DMA per step: pack x | new_x_prev.
    packed = jnp.concatenate([x.astype(jnp.float32), new_x_prev.astype(jnp.float32)],
                             axis=-1)                                       # (G, N, C_in+K)
    # One edge DMA per step: pack src | dst.
    edges = jnp.stack([edge_index[:, 0, :], edge_index[:, 1, :]], axis=-1)  # (G, E, 2)
    edges = edges.astype(jnp.int32)

    # Fold the output-concat offset (K leading zero lanes), the 128-lane padding, and the
    # rel/root fusion into one (2*C_in, W_pad) weight on the host side.
    w_fused = jnp.zeros((2 * C_in, W_pad), jnp.float32)
    w_fused = w_fused.at[:C_in, K:K + C_out].set(params["w_rel"].astype(jnp.float32))
    w_fused = w_fused.at[C_in:, K:K + C_out].set(params["w_root"].astype(jnp.float32))
    b_wide = jnp.zeros((1, W_pad), jnp.float32)
    b_wide = b_wide.at[:, K:K + C_out].set(params["b_rel"].astype(jnp.float32))

    kernel = functools.partial(_single_head_kernel, min_score=float(min_score),
                               c_in=C_in, k_prev=K)

    out_padded = pl.pallas_call(
        kernel,
        out_shape=jax.ShapeDtypeStruct((G, N, W_pad), jnp.float32),
        grid=(G // Gb,),
        in_specs=[
            pl.BlockSpec((Gb, N, C_in + K), lambda g: (g, 0, 0)),   # packed x | prev
            pl.BlockSpec((Gb, E, 2), lambda g: (g, 0, 0)),          # packed src | dst
            pl.BlockSpec((1, C_in), lambda g: (0, 0)),              # w_attn   (shared)
            pl.BlockSpec((2 * C_in, W_pad), lambda g: (0, 0)),      # fused proj weight
            pl.BlockSpec((1, W_pad), lambda g: (0, 0)),             # fused bias
        ],
        out_specs=pl.BlockSpec((Gb, N, W_pad), lambda g: (g, 0, 0)),
        compiler_params=pltpu.CompilerParams(
            dimension_semantics=("parallel",)),                     # megacore-shardable
    )(packed, edges, params["w_attn"].astype(jnp.float32), w_fused, b_wide)

    return out_padded[..., :W]                                      # drop the padding lanes


def single_head_forward(x, edge_index, new_x_prev, params, *, min_score=0.7):
    """Single-graph convenience wrapper (matches the original module's forward)."""
    out = single_head_forward_batched(x[None], edge_index[None], new_x_prev[None],
                                      params, min_score=min_score)
    return out[0]


def init_params(key, in_channels, out_channels):
    k1, k2, k3, k4 = jax.random.split(key, 4)
    return {
        # TopKPooling attention weight: (1, in_channels)
        "w_attn": jax.random.normal(k1, (1, in_channels), jnp.float32) * 0.5,
        # GraphConv lin_rel: Linear(in, out, bias=True)  (stored as (in, out))
        "w_rel": jax.random.normal(k2, (in_channels, out_channels), jnp.float32) * 0.1,
        "b_rel": jax.random.normal(k3, (1, out_channels), jnp.float32) * 0.1,
        # GraphConv lin_root: Linear(in, out, bias=False)
        "w_root": jax.random.normal(k4, (in_channels, out_channels), jnp.float32) * 0.1,
    }


def single_head_reference(x, edge_index, new_x_prev, params, min_score=0.7):
    """Pure-JAX reference for one graph (same math, XLA scatter-add)."""
    s = jnp.sum(x * params["w_attn"], axis=-1)
    score = jax.nn.softmax(s)
    thr = jnp.minimum(jnp.max(score) - 1e-7, min_score)
    keep = (score > thr).astype(x.dtype)[:, None]
    xp = x * score[:, None] * keep
    src, dst = edge_index[0], edge_index[1]
    agg = jnp.zeros_like(x).at[dst].add(xp[src])
    out = agg @ params["w_rel"] + params["b_rel"] + xp @ params["w_root"]
    out = jnp.where(out > 0, out, 0.01 * out) * keep
    return jnp.concatenate([new_x_prev, out], axis=-1)


if __name__ == "__main__":
    key = jax.random.PRNGKey(0)
    k_x, k_e, k_p, k_prev = jax.random.split(key, 4)

    # Small shapes consistent with the module; G=16 graphs so the batched grid uses
    # Gb=8 graphs/step (Gb*N = 128 MXU-native rows) over 2 parallel grid steps.
    G, N, C_in, C_out, E, K_prev = 16, 16, 8, 32, 40, 4

    x = jax.random.normal(k_x, (G, N, C_in), jnp.float32)
    edge_index = jax.random.randint(k_e, (G, 2, E), 0, N, jnp.int32)
    new_x_prev = jax.random.normal(k_prev, (G, N, K_prev), jnp.float32)
    params = init_params(k_p, C_in, C_out)

    result = single_head_forward_batched(x, edge_index, new_x_prev, params, min_score=0.7)
    jax.block_until_ready(result)
    assert result.shape == (G, N, K_prev + C_out)

    # Correctness check against a pure-JAX reference. Tolerance covers the bf16 cast of the
    # pooled node features on the MXU gather/scatter path (one-hots themselves are exact);
    # a structural bug would produce O(1) discrepancies.
    ref = jax.vmap(
        lambda xg, eg, pg: single_head_reference(xg, eg, pg, params, 0.7)
    )(x, edge_index, new_x_prev)
    max_err = float(jnp.max(jnp.abs(result - ref)))
    assert max_err < 0.1, max_err

    print("KERNEL_OK")
</pallas_src>

<mosaic_0001>
module attributes {stable_mosaic.version = 11 : i64} {
  func.func @_single_head_kernel(%arg0: i32, %arg1: memref<8x16x12xf32, #tpu.memory_space<vmem>>, %arg2: memref<8x40x2xi32, #tpu.memory_space<vmem>>, %arg3: memref<1x8xf32, #tpu.memory_space<vmem>>, %arg4: memref<16x128xf32, #tpu.memory_space<vmem>>, %arg5: memref<1x128xf32, #tpu.memory_space<vmem>>, %arg6: memref<8x16x128xf32, #tpu.memory_space<vmem>>) attributes {dimension_semantics = [#tpu.dimension_semantics<parallel>], iteration_bounds = array<i64: 2>, scalar_prefetch = 0 : i64, scratch_operands = 0 : i64, tpu.core_type = #tpu.core_type<tc>, window_params = [{transform_indices = @transform_0, window_bounds = array<i64: 8, 16, 12>}, {transform_indices = @transform_1, window_bounds = array<i64: 8, 40, 2>}, {pipeline_mode = #tpu.pipeline_mode<synchronous>, transform_indices = @transform_2, window_bounds = array<i64: 1, 8>}, {pipeline_mode = #tpu.pipeline_mode<synchronous>, transform_indices = @transform_3, window_bounds = array<i64: 16, 128>}, {pipeline_mode = #tpu.pipeline_mode<synchronous>, transform_indices = @transform_4, window_bounds = array<i64: 1, 128>}, {transform_indices = @transform_5, window_bounds = array<i64: 8, 16, 128>}]} {
    %c0 = arith.constant 0 : index
    %c0_0 = arith.constant 0 : index
    %c0_1 = arith.constant 0 : index
    %0 = vector.load %arg1[%c0, %c0_0, %c0_1] : memref<8x16x12xf32, #tpu.memory_space<vmem>>, vector<8x16x12xf32>
    %1 = vector.extract_strided_slice %0 {offsets = [0, 0, 0], sizes = [8, 16, 8], strides = [1, 1, 1]} : vector<8x16x12xf32> to vector<8x16x8xf32>
    %2 = vector.extract_strided_slice %0 {offsets = [0, 0, 8], sizes = [8, 16, 4], strides = [1, 1, 1]} : vector<8x16x12xf32> to vector<8x16x4xf32>
    %c0_2 = arith.constant 0 : index
    %c0_3 = arith.constant 0 : index
    %3 = vector.load %arg3[%c0_2, %c0_3] : memref<1x8xf32, #tpu.memory_space<vmem>>, vector<1x8xf32>
    %4 = vector.shape_cast %3 : vector<1x8xf32> to vector<1x1x8xf32>
    %5 = vector.broadcast %4 : vector<1x1x8xf32> to vector<8x16x8xf32>
    %6 = arith.mulf %1, %5 : vector<8x16x8xf32>
    %cst = arith.constant dense<0.000000e+00> : vector<8x16xf32>
    %7 = vector.multi_reduction <add>, %6, %cst [2] : vector<8x16x8xf32> to vector<8x16xf32>
    %8 = vector.shape_cast %7 : vector<8x16xf32> to vector<8x16x1xf32>
    %cst_4 = arith.constant dense<0xFF800000> : vector<8x1xf32>
    %9 = vector.multi_reduction <maximumf>, %8, %cst_4 [1] : vector<8x16x1xf32> to vector<8x1xf32>
    %10 = vector.shape_cast %9 : vector<8x1xf32> to vector<8x1x1xf32>
    %11 = vector.broadcast %10 : vector<8x1x1xf32> to vector<8x16x1xf32>
    %12 = arith.subf %8, %11 : vector<8x16x1xf32>
    %13 = math.exp %12 : vector<8x16x1xf32>
    %cst_5 = arith.constant dense<0.000000e+00> : vector<8x1xf32>
    %14 = vector.multi_reduction <add>, %13, %cst_5 [1] : vector<8x16x1xf32> to vector<8x1xf32>
    %15 = vector.shape_cast %14 : vector<8x1xf32> to vector<8x1x1xf32>
    %16 = vector.broadcast %15 : vector<8x1x1xf32> to vector<8x16x1xf32>
    %17 = arith.divf %13, %16 : vector<8x16x1xf32>
    %cst_6 = arith.constant dense<0xFF800000> : vector<8x1xf32>
    %18 = vector.multi_reduction <maximumf>, %17, %cst_6 [1] : vector<8x16x1xf32> to vector<8x1xf32>
    %19 = vector.shape_cast %18 : vector<8x1xf32> to vector<8x1x1xf32>
    %cst_7 = arith.constant 1.000000e-07 : f32
    %20 = vector.broadcast %cst_7 : f32 to vector<8x1x1xf32>
    %21 = arith.subf %19, %20 : vector<8x1x1xf32>
    %cst_8 = arith.constant 0.699999988 : f32
    %22 = vector.broadcast %cst_8 : f32 to vector<8x1x1xf32>
    %23 = arith.minimumf %21, %22 : vector<8x1x1xf32>
    %24 = vector.broadcast %23 : vector<8x1x1xf32> to vector<8x16x1xf32>
    %25 = arith.cmpf ogt, %17, %24 : vector<8x16x1xf32>
    %26 = arith.extui %25 : vector<8x16x1xi1> to vector<8x16x1xi32>
    %27 = arith.sitofp %26 : vector<8x16x1xi32> to vector<8x16x1xf32>
    %28 = vector.broadcast %17 : vector<8x16x1xf32> to vector<8x16x8xf32>
    %29 = arith.mulf %1, %28 : vector<8x16x8xf32>
    %30 = vector.broadcast %27 : vector<8x16x1xf32> to vector<8x16x8xf32>
    %31 = arith.mulf %29, %30 : vector<8x16x8xf32>
    %32 = vector.shape_cast %31 : vector<8x16x8xf32> to vector<128x8xf32>
    %33 = vector.shape_cast %27 : vector<8x16x1xf32> to vector<128x1xf32>
    %c0_9 = arith.constant 0 : index
    %c0_10 = arith.constant 0 : index
    %c0_11 = arith.constant 0 : index
    %34 = vector.load %arg2[%c0_9, %c0_10, %c0_11] : memref<8x40x2xi32, #tpu.memory_space<vmem>>, vector<8x40x2xi32>
    %35 = tpu.iota {dimensions = array<i32: 0>} : vector<8x40x1xi32>
    %c16_i32 = arith.constant 16 : i32
    %36 = vector.broadcast %c16_i32 : i32 to vector<8x40x1xi32>
    %37 = arith.muli %35, %36 : vector<8x40x1xi32>
    %38 = vector.extract_strided_slice %34 {offsets = [0, 0, 0], sizes = [8, 40, 1], strides = [1, 1, 1]} : vector<8x40x2xi32> to vector<8x40x1xi32>
    %39 = arith.addi %38, %37 : vector<8x40x1xi32>
    %40 = vector.extract_strided_slice %34 {offsets = [0, 0, 1], sizes = [8, 40, 1], strides = [1, 1, 1]} : vector<8x40x2xi32> to vector<8x40x1xi32>
    %41 = arith.addi %40, %37 : vector<8x40x1xi32>
    %42 = tpu.iota {dimensions = array<i32: 2>} : vector<8x40x128xi32>
    %43 = vector.broadcast %39 : vector<8x40x1xi32> to vector<8x40x128xi32>
    %44 = arith.cmpi eq, %43, %42 : vector<8x40x128xi32>
    %45 = arith.extui %44 : vector<8x40x128xi1> to vector<8x40x128xi32>
    %46 = arith.sitofp %45 : vector<8x40x128xi32> to vector<8x40x128xf32>
    %47 = arith.truncf %46 : vector<8x40x128xf32> to vector<8x40x128xbf16>
    %48 = vector.shape_cast %47 : vector<8x40x128xbf16> to vector<320x128xbf16>
    %49 = vector.broadcast %41 : vector<8x40x1xi32> to vector<8x40x128xi32>
    %50 = arith.cmpi eq, %49, %42 : vector<8x40x128xi32>
    %51 = arith.extui %50 : vector<8x40x128xi1> to vector<8x40x128xi32>
    %52 = arith.sitofp %51 : vector<8x40x128xi32> to vector<8x40x128xf32>
    %53 = arith.truncf %52 : vector<8x40x128xf32> to vector<8x40x128xbf16>
    %54 = vector.shape_cast %53 : vector<8x40x128xbf16> to vector<320x128xbf16>
    %55 = arith.truncf %32 : vector<128x8xf32> to vector<128x8xbf16>
    %cst_12 = arith.constant dense<0.000000e+00> : vector<320x8xf32>
    %56 = tpu.matmul %48, %55, %cst_12 {dimension_numbers = #tpu.dot_dimension_numbers<[1], [0], [0], [1], [0, 0, 1, 1], [], []>} : vector<320x128xbf16>, vector<128x8xbf16>, vector<320x8xf32> -> vector<320x8xf32>
    %57 = arith.truncf %56 : vector<320x8xf32> to vector<320x8xbf16>
    %cst_13 = arith.constant dense<0.000000e+00> : vector<128x8xf32>
    %58 = tpu.matmul %54, %57, %cst_13 {dimension_numbers = #tpu.dot_dimension_numbers<[0], [0], [1], [1], [0, 1, 1, 1], [], []>} : vector<320x128xbf16>, vector<320x8xbf16>, vector<128x8xf32> -> vector<128x8xf32>
    %59 = tpu.concatenate %58, %32 in 1 : vector<128x8xf32>, vector<128x8xf32> -> vector<128x16xf32>
    %c0_14 = arith.constant 0 : index
    %c0_15 = arith.constant 0 : index
    %60 = vector.load %arg4[%c0_14, %c0_15] : memref<16x128xf32, #tpu.memory_space<vmem>>, vector<16x128xf32>
    %cst_16 = arith.constant dense<0.000000e+00> : vector<128x128xf32>
    %61 = tpu.matmul %59, %60, %cst_16 {dimension_numbers = #tpu.dot_dimension_numbers<[1], [0], [0], [1], [0, 0, 1, 1], [], []>} : vector<128x16xf32>, vector<16x128xf32>, vector<128x128xf32> -> vector<128x128xf32>
    %c0_17 = arith.constant 0 : index
    %c0_18 = arith.constant 0 : index
    %62 = vector.load %arg5[%c0_17, %c0_18] : memref<1x128xf32, #tpu.memory_space<vmem>>, vector<1x128xf32>
    %63 = vector.broadcast %62 : vector<1x128xf32> to vector<128x128xf32>
    %64 = arith.addf %61, %63 : vector<128x128xf32>
    %cst_19 = arith.constant 0.000000e+00 : f32
    %65 = vector.broadcast %cst_19 : f32 to vector<128x128xf32>
    %66 = arith.cmpf ogt, %64, %65 : vector<128x128xf32>
    %cst_20 = arith.constant 0.00999999977 : f32
    %67 = vector.broadcast %cst_20 : f32 to vector<128x128xf32>
    %68 = arith.mulf %67, %64 : vector<128x128xf32>
    %69 = arith.select %66, %64, %68 : vector<128x128xi1>, vector<128x128xf32>
    %70 = vector.broadcast %33 : vector<128x1xf32> to vector<128x128xf32>
    %71 = arith.mulf %69, %70 : vector<128x128xf32>
    %72 = vector.shape_cast %71 : vector<128x128xf32> to vector<8x16x128xf32>
    %c0_21 = arith.constant 0 : index
    %c0_22 = arith.constant 0 : index
    %c0_23 = arith.constant 0 : index
    %73 = vector.load %arg6[%c0_21, %c0_22, %c0_23] : memref<8x16x128xf32, #tpu.memory_space<vmem>>, vector<8x16x128xf32>
    tpu.vector_store %arg6[%c0_21, %c0_22, %c0_23], %72 {strides = array<i32>} : memref<8x16x128xf32, #tpu.memory_space<vmem>>, vector<8x16x128xf32>,
    %c0_24 = arith.constant 0 : index
    %c0_25 = arith.constant 0 : index
    %c0_26 = arith.constant 0 : index
    %74 = vector.load %arg6[%c0_24, %c0_25, %c0_26] : memref<8x16x128xf32, #tpu.memory_space<vmem>>, vector<8x16x4xf32>
    tpu.vector_store %arg6[%c0_24, %c0_25, %c0_26], %2 {strides = array<i32>} : memref<8x16x128xf32, #tpu.memory_space<vmem>>, vector<8x16x4xf32>,
    return
  }
  func.func @transform_0(%arg0: i32) -> (i32, i32, i32) {
    %c0_i32 = arith.constant 0 : i32
    %c0_i32_0 = arith.constant 0 : i32
    %c0_i32_1 = arith.constant 0 : i32
    return %arg0, %c0_i32, %c0_i32_0 : i32, i32, i32
  }
  func.func @transform_1(%arg0: i32) -> (i32, i32, i32) {
    %c0_i32 = arith.constant 0 : i32
    %c0_i32_0 = arith.constant 0 : i32
    %c0_i32_1 = arith.constant 0 : i32
    return %arg0, %c0_i32, %c0_i32_0 : i32, i32, i32
  }
  func.func @transform_2(%arg0: i32) -> (i32, i32) {
    %c0_i32 = arith.constant 0 : i32
    %c0_i32_0 = arith.constant 0 : i32
    %c0_i32_1 = arith.constant 0 : i32
    return %c0_i32, %c0_i32_0 : i32, i32
  }
  func.func @transform_3(%arg0: i32) -> (i32, i32) {
    %c0_i32 = arith.constant 0 : i32
    %c0_i32_0 = arith.constant 0 : i32
    %c0_i32_1 = arith.constant 0 : i32
    return %c0_i32, %c0_i32_0 : i32, i32
  }
  func.func @transform_4(%arg0: i32) -> (i32, i32) {
    %c0_i32 = arith.constant 0 : i32
    %c0_i32_0 = arith.constant 0 : i32
    %c0_i32_1 = arith.constant 0 : i32
    return %c0_i32, %c0_i32_0 : i32, i32
  }
  func.func @transform_5(%arg0: i32) -> (i32, i32, i32) {
    %c0_i32 = arith.constant 0 : i32
    %c0_i32_0 = arith.constant 0 : i32
    %c0_i32_1 = arith.constant 0 : i32
    return %arg0, %c0_i32, %c0_i32_0 : i32, i32, i32
  }
}

</mosaic_0001>

<llo_original>
// kernel: tpu_custom_call.1
$region0: #{tpu_custom_call.1}
  #allocation0 [shape = 'u32[]', space=smem, size = 0x4, offset = 0x4, fixed_abs, tag = 'smem constant byte address 0x4 - core index']
  #allocation1 [shape = 'u32[144,128]{1,0:T(1,128)}', space=vmem, size = 0x12000, scoped, tag = 'internal scratch']
  %s0 = inlined_call_operand.vmem [shape: f32[16,16,12], index: 0, kind: input, shape index: {}]
  %s1 = inlined_call_operand.vmem [shape: s32[16,40,2], index: 1, kind: input, shape index: {}]
  %s2 = inlined_call_operand.vmem [shape: f32[1,8], index: 2, kind: input, shape index: {}]
  %s3 = inlined_call_operand.vmem [shape: f32[16,128], index: 3, kind: input, shape index: {}]
  %s4 = inlined_call_operand.vmem [shape: f32[1,128], index: 4, kind: input, shape index: {}]
  %s5 = inlined_call_operand.hbm [shape: f32[16,16,128], index: 5, kind: output, shape index: {}]
  %s6 = sld [smem:[#allocation0]]
  $region53: #{tpu_custom_call.1} parent=0
    _
  %s8 = ssub.s32 1, %s6
  %s9 = scalar_select 0, %s8, %s6
  $region1: #{tpu_custom_call.1} parent=0
    #allocation2 [shape = 'u8[131072]{0}', space=vmem, size = 0x20000, scoped, tag = 'output window, operand 0']
    #allocation3 [shape = 's32[2]{0}', space=sflag, size = 0x8, scoped, tag = 'scoped memory for tpu_custom_call.1']
    %10 = vsyncpa [#allocation3], 0
    %s11 = scalar_lea.sflag [#allocation3], 1
    %12 = vsyncpa %s11, 0
    loop: start=0, step=1, limit=4
    $region2: #{tpu_custom_call.1} parent=1 // loop_pre_header
      _
    $region3: #{tpu_custom_call.1} parent=1 // loop_header
      %s14 = sphi 0, %s18
      %p15 = scmp.ge.s32.totalorder %s14, 4
      %s24 = sphi 0, %s26
      %s27 = sphi 0, %s24
      %s28 = sphi 0, %s27
      %s44 = sphi 0, %s28
      %s50 = sphi 0, %s52
      %s53 = sphi 0, %s50
      %s54 = sphi 0, %s53
      %s70 = sphi 0, %s54
      %s74 = sphi 0, %s74
      %s76 = sphi 0, %s74
      %s77 = sphi 0, %s76
      %s91 = sphi 0, %s77
      %s95 = sphi 0, %s95
      %s97 = sphi 0, %s95
      %s98 = sphi 0, %s97
      %s112 = sphi 0, %s98
      %s116 = sphi 0, %s116
      %s118 = sphi 0, %s116
      %s119 = sphi 0, %s118
      %s133 = sphi 0, %s119
      %s139 = sphi 0, %s141
      %s142 = sphi 0, %s139
      %s143 = sphi 0, %s142
      %s159 = sphi 0, %s143
    $region4: #{tpu_custom_call.1} parent=1 // loop_header_branch
      %17 = sbr.rel (%p15) target = $region8
    $region5: #{tpu_custom_call.1} parent=1 // loop_body
      %s19 = ssub.s32 %s14, 1
      %s20 = ssub.s32 %s14, 2
      %s21 = sadd.s32 %s14, 1
      %s22 = ssub.s32 %s14, %s21
      %p23 = scmp.eq.s32.totalorder %s22, 0
      %s25 = sadd.s32 %s24, 1
      %s26 = scalar_select %p23, %s24, %s25
      %p29 = pneg %p23
      %p30 = scmp.eq.s32.totalorder %s14, 1
      %p31 = por %p29, %p30
      %p32 = scmp.ne.s32.totalorder %s24, %s27
      %p33 = scmp.eq.s32.totalorder %s14, 0
      %p34 = por %p32, %p33
      %p35 = scmp.ne.s32.totalorder %s24, %s27
      %p36 = scmp.eq.s32.totalorder %s19, 1
      %p37 = por %p35, %p36
      %p38 = scmp.ne.s32.totalorder %s27, %s28
      %p39 = scmp.eq.s32.totalorder %s19, 0
      %p40 = por %p38, %p39
      %p41 = scmp.ne.s32.totalorder %s27, %s28
      %p42 = scmp.eq.s32.totalorder %s20, 1
      %p43 = por %p41, %p42
      %p45 = scmp.ne.s32.totalorder %s28, %s44
      %p46 = scmp.eq.s32.totalorder %s20, 0
      %p47 = por %p45, %p46
      %s48 = ssub.s32 %s14, %s21
      %p49 = scmp.eq.s32.totalorder %s48, 0
      %s51 = sadd.s32 %s50, 1
      %s52 = scalar_select %p49, %s50, %s51
      %p55 = pneg %p49
      %p56 = scmp.eq.s32.totalorder %s14, 1
      %p57 = por %p55, %p56
      %p58 = scmp.ne.s32.totalorder %s50, %s53
      %p59 = scmp.eq.s32.totalorder %s14, 0
      %p60 = por %p58, %p59
      %p61 = scmp.ne.s32.totalorder %s50, %s53
      %p62 = scmp.eq.s32.totalorder %s19, 1
      %p63 = por %p61, %p62
      %p64 = scmp.ne.s32.totalorder %s53, %s54
      %p65 = scmp.eq.s32.totalorder %s19, 0
      %p66 = por %p64, %p65
      %p67 = scmp.ne.s32.totalorder %s53, %s54
      %p68 = scmp.eq.s32.totalorder %s20, 1
      %p69 = por %p67, %p68
      %p71 = scmp.ne.s32.totalorder %s54, %s70
      %p72 = scmp.eq.s32.totalorder %s20, 0
      %p73 = por %p71, %p72
      %s75 = sadd.s32 %s74, 1
      %p78 = scmp.eq.s32.totalorder %s14, 1
      %p79 = scmp.ne.s32.totalorder %s74, %s76
      %p80 = scmp.eq.s32.totalorder %s14, 0
      %p81 = por %p79, %p80
      %p82 = scmp.ne.s32.totalorder %s74, %s76
      %p83 = scmp.eq.s32.totalorder %s19, 1
      %p84 = por %p82, %p83
      %p85 = scmp.ne.s32.totalorder %s76, %s77
      %p86 = scmp.eq.s32.totalorder %s19, 0
      %p87 = por %p85, %p86
      %p88 = scmp.ne.s32.totalorder %s76, %s77
      %p89 = scmp.eq.s32.totalorder %s20, 1
      %p90 = por %p88, %p89
      %p92 = scmp.ne.s32.totalorder %s77, %s91
      %p93 = scmp.eq.s32.totalorder %s20, 0
      %p94 = por %p92, %p93
      %s96 = sadd.s32 %s95, 1
      %p99 = scmp.eq.s32.totalorder %s14, 1
      %p100 = scmp.ne.s32.totalorder %s95, %s97
      %p101 = scmp.eq.s32.totalorder %s14, 0
      %p102 = por %p100, %p101
      %p103 = scmp.ne.s32.totalorder %s95, %s97
      %p104 = scmp.eq.s32.totalorder %s19, 1
      %p105 = por %p103, %p104
      %p106 = scmp.ne.s32.totalorder %s97, %s98
      %p107 = scmp.eq.s32.totalorder %s19, 0
      %p108 = por %p106, %p107
      %p109 = scmp.ne.s32.totalorder %s97, %s98
      %p110 = scmp.eq.s32.totalorder %s20, 1
      %p111 = por %p109, %p110
      %p113 = scmp.ne.s32.totalorder %s98, %s112
      %p114 = scmp.eq.s32.totalorder %s20, 0
      %p115 = por %p113, %p114
      %s117 = sadd.s32 %s116, 1
      %p120 = scmp.eq.s32.totalorder %s14, 1
      %p121 = scmp.ne.s32.totalorder %s116, %s118
      %p122 = scmp.eq.s32.totalorder %s14, 0
      %p123 = por %p121, %p122
      %p124 = scmp.ne.s32.totalorder %s116, %s118
      %p125 = scmp.eq.s32.totalorder %s19, 1
      %p126 = por %p124, %p125
      %p127 = scmp.ne.s32.totalorder %s118, %s119
      %p128 = scmp.eq.s32.totalorder %s19, 0
      %p129 = por %p127, %p128
      %p130 = scmp.ne.s32.totalorder %s118, %s119
      %p131 = scmp.eq.s32.totalorder %s20, 1
      %p132 = por %p130, %p131
      %p134 = scmp.ne.s32.totalorder %s119, %s133
      %p135 = scmp.eq.s32.totalorder %s20, 0
      %p136 = por %p134, %p135
      %s137 = ssub.s32 %s14, %s21
      %p138 = scmp.eq.s32.totalorder %s137, 0
      %s140 = sadd.s32 %s139, 1
      %s141 = scalar_select %p138, %s139, %s140
      %p144 = pneg %p138
      %p145 = scmp.eq.s32.totalorder %s14, 1
      %p146 = por %p144, %p145
      %p147 = scmp.ne.s32.totalorder %s139, %s142
      %p148 = scmp.eq.s32.totalorder %s14, 0
      %p149 = por %p147, %p148
      %p150 = scmp.ne.s32.totalorder %s139, %s142
      %p151 = scmp.eq.s32.totalorder %s19, 1
      %p152 = por %p150, %p151
      %p153 = scmp.ne.s32.totalorder %s142, %s143
      %p154 = scmp.eq.s32.totalorder %s19, 0
      %p155 = por %p153, %p154
      %p156 = scmp.ne.s32.totalorder %s142, %s143
      %p157 = scmp.eq.s32.totalorder %s20, 1
      %p158 = por %p156, %p157
      %p160 = scmp.ne.s32.totalorder %s143, %s159
      %p161 = scmp.eq.s32.totalorder %s20, 0
      %p162 = por %p160, %p161
      %p163 = scmp.le.s32.totalorder 1, %s14
      %p164 = scmp.lt.s32.totalorder %s14, 3
      %p165 = pnand %p163, %p164
      %p166 = pneg %p165
      // Predicated region
      $region9: #{tpu_custom_call.1} parent=5 // pred_check
        _
      $region10: #{tpu_custom_call.1} parent=5 // pred_check_branch
        %168 = sbr.rel (%p165) target = $region12
      $region11: #{tpu_custom_call.1} parent=5 // pred_region
        %s169 = ssub.s32 %s14, 1
        // Predicated region
        $region13: #{tpu_custom_call.1} parent=11 // pred_check
          %p170 = pneg %p87
        $region14: #{tpu_custom_call.1} parent=11 // pred_check_branch
          %172 = sbr.rel (%p170) target = $region16
        $region15: #{tpu_custom_call.1} parent=11 // pred_region
          _
        $region16: #{tpu_custom_call.1} parent=11 // pred_fallthru
          _
        // Predicated region
        $region17: #{tpu_custom_call.1} parent=11 // pred_check
          %p173 = pneg %p108
        $region18: #{tpu_custom_call.1} parent=11 // pred_check_branch
          %175 = sbr.rel (%p173) target = $region20
        $region19: #{tpu_custom_call.1} parent=11 // pred_region
          _
        $region20: #{tpu_custom_call.1} parent=11 // pred_fallthru
          _
        // Predicated region
        $region21: #{tpu_custom_call.1} parent=11 // pred_check
          %p176 = pneg %p129
        $region22: #{tpu_custom_call.1} parent=11 // pred_check_branch
          %178 = sbr.rel (%p176) target = $region24
        $region23: #{tpu_custom_call.1} parent=11 // pred_region
          _
        $region24: #{tpu_custom_call.1} parent=11 // pred_fallthru
          _
      $region12: #{tpu_custom_call.1} parent=5 // pred_fallthru
        _
      %p179 = scmp.lt.s32.totalorder %s14, 2
      // Predicated region
      $region25: #{tpu_custom_call.1} parent=5 // pred_check
        %p180 = pneg %p179
      $region26: #{tpu_custom_call.1} parent=5 // pred_check_branch
        %182 = sbr.rel (%p180) target = $region28
      $region27: #{tpu_custom_call.1} parent=5 // pred_region
        // Predicated region
        $region29: #{tpu_custom_call.1} parent=27 // pred_check
          %p183 = pneg %p34
        $region30: #{tpu_custom_call.1} parent=27 // pred_check_branch
          %185 = sbr.rel (%p183) target = $region32
        $region31: #{tpu_custom_call.1} parent=27 // pred_region
          %s186 = smul.u32 8, %s14
          %p187 = scmp.lt.s32.totalorder %s186, 15
          %s188 = scalar_select %p187, %s186, 15
          %s189 = smul.addr %s188, 2
          %s190 = smul.addr %s189, 8
          %s191 = scalar_lea.vmem %s0, %s190
          %s192 = smul.u32 8, %s14
        $region32: #{tpu_custom_call.1} parent=27 // pred_fallthru
          _
        // Predicated region
        $region33: #{tpu_custom_call.1} parent=27 // pred_check
          %p193 = pneg %p60
        $region34: #{tpu_custom_call.1} parent=27 // pred_check_branch
          %195 = sbr.rel (%p193) target = $region36
        $region35: #{tpu_custom_call.1} parent=27 // pred_region
          %s196 = smul.u32 8, %s14
          %p197 = scmp.lt.s32.totalorder %s196, 15
          %s198 = scalar_select %p197, %s196, 15
          %s199 = smul.addr %s198, 5
          %s200 = smul.addr %s199, 8
          %s201 = scalar_lea.vmem %s1, %s200
          %s202 = smul.u32 8, %s14
        $region36: #{tpu_custom_call.1} parent=27 // pred_fallthru
          _
      $region28: #{tpu_custom_call.1} parent=5 // pred_fallthru
        _
      %p203 = scmp.le.s32.totalorder 1, %s14
      %p204 = scmp.lt.s32.totalorder %s14, 3
      %p205 = pnand %p203, %p204
      %p206 = pneg %p205
      // Predicated region
      $region37: #{tpu_custom_call.1} parent=5 // pred_check
        _
      $region38: #{tpu_custom_call.1} parent=5 // pred_check_branch
        %208 = sbr.rel (%p205) target = $region40
      $region39: #{tpu_custom_call.1} parent=5 // pred_region
        %s209 = ssub.s32 %s14, 1
        %s210 = smul.u32 8, %s19
        %p211 = scmp.lt.s32.totalorder %s210, 15
        %s212 = scalar_select %p211, %s210, 15
        %s213 = smul.addr %s212, 2
        %s214 = smul.addr %s213, 8
        %s215 = scalar_lea.vmem %s0, %s214
        %p216 = pneg %p40
        %p217 = pneg %p37
        %s218 = smul.u32 8, %s19
        %p219 = scmp.lt.s32.totalorder %s218, 15
        %s220 = scalar_select %p219, %s218, 15
        %s221 = smul.addr %s220, 5
        %s222 = smul.addr %s221, 8
        %s223 = scalar_lea.vmem %s1, %s222
        %p224 = pneg %p66
        %p225 = pneg %p63
        %p226 = pneg %p87
        %p227 = pneg %p84
        %p228 = pneg %p108
        %p229 = pneg %p105
        %p230 = pneg %p129
        %p231 = pneg %p126
        %p232 = pneg %p155
        %p233 = pneg %p152
        %s234 = sand.u32 %s142, 1
        %s235 = scalar_lea.sflag [#allocation3], %s234
        %s236 = sand.u32 %s142, 1
        %s237 = smul.addr %s236, 128
        %s238 = scalar_lea.vmem [#allocation2], %s237
        %s239 = smul.u32 8, %s19
        %p240 = scmp.lt.s32.totalorder %s239, 15
        %s241 = scalar_select %p240, %s239, 15
        %s242 = smul.addr %s241, 2
        %s243 = smul.addr %s242, 8
        %s244 = scalar_lea.vmem %s0, %s243
        %s245 = smul.u32 8, %s19
        %s246 = smul.u32 8, %s19
        %p247 = scmp.lt.s32.totalorder %s246, 15
        %s248 = scalar_select %p247, %s246, 15
        %s249 = smul.addr %s248, 5
        %s250 = smul.addr %s249, 8
        %s251 = scalar_lea.vmem %s1, %s250
        %s252 = smul.u32 8, %s19
        %s253 = smul.u32 8, %s19
        %v255 = vld [vmem:[%s244] sm:$0xff]
        %v256 = vld [vmem:[%s244 + $0x8] sm:$0xff]
        %v257 = vld [vmem:[%s244 + $0x10] sm:$0xff]
        %v258 = vld [vmem:[%s244 + $0x18] sm:$0xff]
        %v259 = vld [vmem:[%s244 + $0x20] sm:$0xff]
        %v260 = vld [vmem:[%s244 + $0x28] sm:$0xff]
        %v261 = vld [vmem:[%s244 + $0x30] sm:$0xff]
        %v262 = vld [vmem:[%s244 + $0x38] sm:$0xff]
        %v263 = vld [vmem:[%s244 + $0x40] sm:$0xff]
        %v264 = vld [vmem:[%s244 + $0x48] sm:$0xff]
        %v265 = vld [vmem:[%s244 + $0x50] sm:$0xff]
        %v266 = vld [vmem:[%s244 + $0x58] sm:$0xff]
        %v267 = vld [vmem:[%s244 + $0x60] sm:$0xff]
        %v268 = vld [vmem:[%s244 + $0x68] sm:$0xff]
        %v269 = vld [vmem:[%s244 + $0x70] sm:$0xff]
        %v270 = vld [vmem:[%s244 + $0x78] sm:$0xff]
        %v271 = vld [vmem:[%s2] sm:$0x1]
        %v273 = vlaneseq
        %v274 = vshrl.u32 %v273, 7
        %v275 = vsub.s32 0, %v274
        %v276 = vrot.slane %v271, %v275
        %v278 = vmul.f32 %v255, %v276
        %v279 = vmul.f32 %v256, %v276
        %v280 = vmul.f32 %v257, %v276
        %v281 = vmul.f32 %v258, %v276
        %v282 = vmul.f32 %v259, %v276
        %v283 = vmul.f32 %v260, %v276
        %v284 = vmul.f32 %v261, %v276
        %v285 = vmul.f32 %v262, %v276
        %v286 = vmul.f32 %v263, %v276
        %v287 = vmul.f32 %v264, %v276
        %v288 = vmul.f32 %v265, %v276
        %v289 = vmul.f32 %v266, %v276
        %v290 = vmul.f32 %v267, %v276
        %v291 = vmul.f32 %v268, %v276
        %v292 = vmul.f32 %v269, %v276
        %v293 = vmul.f32 %v270, %v276
        %vm294 = vcmask 64512
        %v295 = vsel %vm294, %v278, 0.0
        %296 = vadd.xlane.f32.xlu0 %v295
        %v297 = vpop.xlane.xlu0 %296
        %v298 = vsel %vm294, %v279, 0.0
        %299 = vadd.xlane.f32.xlu0 %v298
        %v300 = vpop.xlane.xlu0 %299
        %v301 = vsel %vm294, %v280, 0.0
        %302 = vadd.xlane.f32.xlu0 %v301
        %v303 = vpop.xlane.xlu0 %302
        %v304 = vsel %vm294, %v281, 0.0
        %305 = vadd.xlane.f32.xlu0 %v304
        %v306 = vpop.xlane.xlu0 %305
        %v307 = vsel %vm294, %v282, 0.0
        %308 = vadd.xlane.f32.xlu0 %v307
        %v309 = vpop.xlane.xlu0 %308
        %v310 = vsel %vm294, %v283, 0.0
        %311 = vadd.xlane.f32.xlu0 %v310
        %v312 = vpop.xlane.xlu0 %311
        %v313 = vsel %vm294, %v284, 0.0
        %314 = vadd.xlane.f32.xlu0 %v313
        %v315 = vpop.xlane.xlu0 %314
        %v316 = vsel %vm294, %v285, 0.0
        %317 = vadd.xlane.f32.xlu0 %v316
        %v318 = vpop.xlane.xlu0 %317
        %v319 = vsel %vm294, %v286, 0.0
        %320 = vadd.xlane.f32.xlu0 %v319
        %v321 = vpop.xlane.xlu0 %320
        %v322 = vsel %vm294, %v287, 0.0
        %323 = vadd.xlane.f32.xlu0 %v322
        %v324 = vpop.xlane.xlu0 %323
        %v325 = vsel %vm294, %v288, 0.0
        %326 = vadd.xlane.f32.xlu0 %v325
        %v327 = vpop.xlane.xlu0 %326
        %v328 = vsel %vm294, %v289, 0.0
        %329 = vadd.xlane.f32.xlu0 %v328
        %v330 = vpop.xlane.xlu0 %329
        %v331 = vsel %vm294, %v290, 0.0
        %332 = vadd.xlane.f32.xlu0 %v331
        %v333 = vpop.xlane.xlu0 %332
        %v334 = vsel %vm294, %v291, 0.0
        %335 = vadd.xlane.f32.xlu0 %v334
        %v336 = vpop.xlane.xlu0 %335
        %v337 = vsel %vm294, %v292, 0.0
        %338 = vadd.xlane.f32.xlu0 %v337
        %v339 = vpop.xlane.xlu0 %338
        %v340 = vsel %vm294, %v293, 0.0
        %341 = vadd.xlane.f32.xlu0 %v340
        %v342 = vpop.xlane.xlu0 %341
        %v343 = vmax.f32 %v297, %v300
        %v344 = vrot.slane %v343, 4
        %v345 = vmax.f32 %v343, %v344
        %v346 = vrot.slane %v345, 2
        %v347 = vmax.f32 %v345, %v346
        %v348 = vrot.slane %v347, 1
        %v349 = vmax.f32 %v347, %v348
        %v350 = vmax.f32 %v303, %v306
        %v351 = vrot.slane %v350, 4
        %v352 = vmax.f32 %v350, %v351
        %v353 = vrot.slane %v352, 2
        %v354 = vmax.f32 %v352, %v353
        %v355 = vrot.slane %v354, 1
        %v356 = vmax.f32 %v354, %v355
        %v357 = vmax.f32 %v309, %v312
        %v358 = vrot.slane %v357, 4
        %v359 = vmax.f32 %v357, %v358
        %v360 = vrot.slane %v359, 2
        %v361 = vmax.f32 %v359, %v360
        %v362 = vrot.slane %v361, 1
        %v363 = vmax.f32 %v361, %v362
        %v364 = vmax.f32 %v315, %v318
        %v365 = vrot.slane %v364, 4
        %v366 = vmax.f32 %v364, %v365
        %v367 = vrot.slane %v366, 2
        %v368 = vmax.f32 %v366, %v367
        %v369 = vrot.slane %v368, 1
        %v370 = vmax.f32 %v368, %v369
        %v371 = vmax.f32 %v321, %v324
        %v372 = vrot.slane %v371, 4
        %v373 = vmax.f32 %v371, %v372
        %v374 = vrot.slane %v373, 2
        %v375 = vmax.f32 %v373, %v374
        %v376 = vrot.slane %v375, 1
        %v377 = vmax.f32 %v375, %v376
        %v378 = vmax.f32 %v327, %v330
        %v379 = vrot.slane %v378, 4
        %v380 = vmax.f32 %v378, %v379
        %v381 = vrot.slane %v380, 2
        %v382 = vmax.f32 %v380, %v381
        %v383 = vrot.slane %v382, 1
        %v384 = vmax.f32 %v382, %v383
        %v385 = vmax.f32 %v333, %v336
        %v386 = vrot.slane %v385, 4
        %v387 = vmax.f32 %v385, %v386
        %v388 = vrot.slane %v387, 2
        %v389 = vmax.f32 %v387, %v388
        %v390 = vrot.slane %v389, 1
        %v391 = vmax.f32 %v389, %v390
        %v392 = vmax.f32 %v339, %v342
        %v393 = vrot.slane %v392, 4
        %v394 = vmax.f32 %v392, %v393
        %v395 = vrot.slane %v394, 2
        %v396 = vmax.f32 %v394, %v395
        %v397 = vrot.slane %v396, 1
        %v398 = vmax.f32 %v396, %v397
        %v399 = vsub.f32 %v297, %v349
        %v400 = vsub.f32 %v300, %v349
        %v401 = vsub.f32 %v303, %v356
        %v402 = vsub.f32 %v306, %v356
        %v403 = vsub.f32 %v309, %v363
        %v404 = vsub.f32 %v312, %v363
        %v405 = vsub.f32 %v315, %v370
        %v406 = vsub.f32 %v318, %v370
        %v407 = vsub.f32 %v321, %v377
        %v408 = vsub.f32 %v324, %v377
        %v409 = vsub.f32 %v327, %v384
        %v410 = vsub.f32 %v330, %v384
        %v411 = vsub.f32 %v333, %v391
        %v412 = vsub.f32 %v336, %v391
        %v413 = vsub.f32 %v339, %v398
        %v414 = vsub.f32 %v342, %v398
        %v415 = vmul.f32 %v399, 1.442695
        %v416 = vpow.pop %v415
        %v417 = vmul.f32 %v400, 1.442695
        %v418 = vpow.pop %v417
        %v419 = vmul.f32 %v401, 1.442695
        %v420 = vpow.pop %v419
        %v421 = vmul.f32 %v402, 1.442695
        %v422 = vpow.pop %v421
        %v423 = vmul.f32 %v403, 1.442695
        %v424 = vpow.pop %v423
        %v425 = vmul.f32 %v404, 1.442695
        %v426 = vpow.pop %v425
        %v427 = vmul.f32 %v405, 1.442695
        %v428 = vpow.pop %v427
        %v429 = vmul.f32 %v406, 1.442695
        %v430 = vpow.pop %v429
        %v431 = vmul.f32 %v407, 1.442695
        %v432 = vpow.pop %v431
        %v433 = vmul.f32 %v408, 1.442695
        %v434 = vpow.pop %v433
        %v435 = vmul.f32 %v409, 1.442695
        %v436 = vpow.pop %v435
        %v437 = vmul.f32 %v410, 1.442695
        %v438 = vpow.pop %v437
        %v439 = vmul.f32 %v411, 1.442695
        %v440 = vpow.pop %v439
        %v441 = vmul.f32 %v412, 1.442695
        %v442 = vpow.pop %v441
        %v443 = vmul.f32 %v413, 1.442695
        %v444 = vpow.pop %v443
        %v445 = vmul.f32 %v414, 1.442695
        %v446 = vpow.pop %v445
        %v447 = vadd.f32 %v416, %v418
        %v448 = vrot.slane %v447, 4
        %v449 = vadd.f32 %v447, %v448
        %v450 = vrot.slane %v449, 2
        %v451 = vadd.f32 %v449, %v450
        %v452 = vrot.slane %v451, 1
        %v453 = vadd.f32 %v451, %v452
        %v454 = vadd.f32 %v420, %v422
        %v455 = vrot.slane %v454, 4
        %v456 = vadd.f32 %v454, %v455
        %v457 = vrot.slane %v456, 2
        %v458 = vadd.f32 %v456, %v457
        %v459 = vrot.slane %v458, 1
        %v460 = vadd.f32 %v458, %v459
        %v461 = vadd.f32 %v424, %v426
        %v462 = vrot.slane %v461, 4
        %v463 = vadd.f32 %v461, %v462
        %v464 = vrot.slane %v463, 2
        %v465 = vadd.f32 %v463, %v464
        %v466 = vrot.slane %v465, 1
        %v467 = vadd.f32 %v465, %v466
        %v468 = vadd.f32 %v428, %v430
        %v469 = vrot.slane %v468, 4
        %v470 = vadd.f32 %v468, %v469
        %v471 = vrot.slane %v470, 2
        %v472 = vadd.f32 %v470, %v471
        %v473 = vrot.slane %v472, 1
        %v474 = vadd.f32 %v472, %v473
        %v475 = vadd.f32 %v432, %v434
        %v476 = vrot.slane %v475, 4
        %v477 = vadd.f32 %v475, %v476
        %v478 = vrot.slane %v477, 2
        %v479 = vadd.f32 %v477, %v478
        %v480 = vrot.slane %v479, 1
        %v481 = vadd.f32 %v479, %v480
        %v482 = vadd.f32 %v436, %v438
        %v483 = vrot.slane %v482, 4
        %v484 = vadd.f32 %v482, %v483
        %v485 = vrot.slane %v484, 2
        %v486 = vadd.f32 %v484, %v485
        %v487 = vrot.slane %v486, 1
        %v488 = vadd.f32 %v486, %v487
        %v489 = vadd.f32 %v440, %v442
        %v490 = vrot.slane %v489, 4
        %v491 = vadd.f32 %v489, %v490
        %v492 = vrot.slane %v491, 2
        %v493 = vadd.f32 %v491, %v492
        %v494 = vrot.slane %v493, 1
        %v495 = vadd.f32 %v493, %v494
        %v496 = vadd.f32 %v444, %v446
        %v497 = vrot.slane %v496, 4
        %v498 = vadd.f32 %v496, %v497
        %v499 = vrot.slane %v498, 2
        %v500 = vadd.f32 %v498, %v499
        %v501 = vrot.slane %v500, 1
        %v502 = vadd.f32 %v500, %v501
        %v503 = vrcp.pop %v453
        %v504 = vmul.f32 %v416, %v503
        %v505 = vmul.f32 %v418, %v503
        %v506 = vrcp.pop %v460
        %v507 = vmul.f32 %v420, %v506
        %v508 = vmul.f32 %v422, %v506
        %v509 = vrcp.pop %v467
        %v510 = vmul.f32 %v424, %v509
        %v511 = vmul.f32 %v426, %v509
        %v512 = vrcp.pop %v474
        %v513 = vmul.f32 %v428, %v512
        %v514 = vmul.f32 %v430, %v512
        %v515 = vrcp.pop %v481
        %v516 = vmul.f32 %v432, %v515
        %v517 = vmul.f32 %v434, %v515
        %v518 = vrcp.pop %v488
        %v519 = vmul.f32 %v436, %v518
        %v520 = vmul.f32 %v438, %v518
        %v521 = vrcp.pop %v495
        %v522 = vmul.f32 %v440, %v521
        %v523 = vmul.f32 %v442, %v521
        %v524 = vrcp.pop %v502
        %v525 = vmul.f32 %v444, %v524
        %v526 = vmul.f32 %v446, %v524
        %v527 = vmax.f32 %v504, %v505
        %v528 = vrot.slane %v527, 4
        %v529 = vmax.f32 %v527, %v528
        %v530 = vrot.slane %v529, 2
        %v531 = vmax.f32 %v529, %v530
        %v532 = vrot.slane %v531, 1
        %v533 = vmax.f32 %v531, %v532
        %v534 = vmax.f32 %v507, %v508
        %v535 = vrot.slane %v534, 4
        %v536 = vmax.f32 %v534, %v535
        %v537 = vrot.slane %v536, 2
        %v538 = vmax.f32 %v536, %v537
        %v539 = vrot.slane %v538, 1
        %v540 = vmax.f32 %v538, %v539
        %v541 = vmax.f32 %v510, %v511
        %v542 = vrot.slane %v541, 4
        %v543 = vmax.f32 %v541, %v542
        %v544 = vrot.slane %v543, 2
        %v545 = vmax.f32 %v543, %v544
        %v546 = vrot.slane %v545, 1
        %v547 = vmax.f32 %v545, %v546
        %v548 = vmax.f32 %v513, %v514
        %v549 = vrot.slane %v548, 4
        %v550 = vmax.f32 %v548, %v549
        %v551 = vrot.slane %v550, 2
        %v552 = vmax.f32 %v550, %v551
        %v553 = vrot.slane %v552, 1
        %v554 = vmax.f32 %v552, %v553
        %v555 = vmax.f32 %v516, %v517
        %v556 = vrot.slane %v555, 4
        %v557 = vmax.f32 %v555, %v556
        %v558 = vrot.slane %v557, 2
        %v559 = vmax.f32 %v557, %v558
        %v560 = vrot.slane %v559, 1
        %v561 = vmax.f32 %v559, %v560
        %v562 = vmax.f32 %v519, %v520
        %v563 = vrot.slane %v562, 4
        %v564 = vmax.f32 %v562, %v563
        %v565 = vrot.slane %v564, 2
        %v566 = vmax.f32 %v564, %v565
        %v567 = vrot.slane %v566, 1
        %v568 = vmax.f32 %v566, %v567
        %v569 = vmax.f32 %v522, %v523
        %v570 = vrot.slane %v569, 4
        %v571 = vmax.f32 %v569, %v570
        %v572 = vrot.slane %v571, 2
        %v573 = vmax.f32 %v571, %v572
        %v574 = vrot.slane %v573, 1
        %v575 = vmax.f32 %v573, %v574
        %v576 = vmax.f32 %v525, %v526
        %v577 = vrot.slane %v576, 4
        %v578 = vmax.f32 %v576, %v577
        %v579 = vrot.slane %v578, 2
        %v580 = vmax.f32 %v578, %v579
        %v581 = vrot.slane %v580, 1
        %v582 = vmax.f32 %v580, %v581
        %v583 = vsub.f32 %v533, 1e-07
        %v584 = vsub.f32 %v540, 1e-07
        %v585 = vsub.f32 %v547, 1e-07
        %v586 = vsub.f32 %v554, 1e-07
        %v587 = vsub.f32 %v561, 1e-07
        %v588 = vsub.f32 %v568, 1e-07
        %v589 = vsub.f32 %v575, 1e-07
        %v590 = vsub.f32 %v582, 1e-07
        %v591 = vmin.f32 %v583, 0.7
        %v592 = vmin.f32 %v584, 0.7
        %v593 = vmin.f32 %v585, 0.7
        %v594 = vmin.f32 %v586, 0.7
        %v595 = vmin.f32 %v587, 0.7
        %v596 = vmin.f32 %v588, 0.7
        %v597 = vmin.f32 %v589, 0.7
        %v598 = vmin.f32 %v590, 0.7
        %vm599 = vcmp.gt.f32.partialorder %v504, %v591
        %vm600 = vcmp.gt.f32.partialorder %v505, %v591
        %vm601 = vcmp.gt.f32.partialorder %v507, %v592
        %vm602 = vcmp.gt.f32.partialorder %v508, %v592
        %vm603 = vcmp.gt.f32.partialorder %v510, %v593
        %vm604 = vcmp.gt.f32.partialorder %v511, %v593
        %vm605 = vcmp.gt.f32.partialorder %v513, %v594
        %vm606 = vcmp.gt.f32.partialorder %v514, %v594
        %vm607 = vcmp.gt.f32.partialorder %v516, %v595
        %vm608 = vcmp.gt.f32.partialorder %v517, %v595
        %vm609 = vcmp.gt.f32.partialorder %v519, %v596
        %vm610 = vcmp.gt.f32.partialorder %v520, %v596
        %vm611 = vcmp.gt.f32.partialorder %v522, %v597
        %vm612 = vcmp.gt.f32.partialorder %v523, %v597
        %vm613 = vcmp.gt.f32.partialorder %v525, %v598
        %vm614 = vcmp.gt.f32.partialorder %v526, %v598
        %v615 = vsel %vm599, 1, 0
        %v616 = vsel %vm600, 1, 0
        %v617 = vsel %vm601, 1, 0
        %v618 = vsel %vm602, 1, 0
        %v619 = vsel %vm603, 1, 0
        %v620 = vsel %vm604, 1, 0
        %v621 = vsel %vm605, 1, 0
        %v622 = vsel %vm606, 1, 0
        %v623 = vsel %vm607, 1, 0
        %v624 = vsel %vm608, 1, 0
        %v625 = vsel %vm609, 1, 0
        %v626 = vsel %vm610, 1, 0
        %v627 = vsel %vm611, 1, 0
        %v628 = vsel %vm612, 1, 0
        %v629 = vsel %vm613, 1, 0
        %v630 = vsel %vm614, 1, 0
        %v631 = vcvt.s32.f32 %v615
        %v632 = vcvt.s32.f32 %v616
        %v633 = vcvt.s32.f32 %v617
        %v634 = vcvt.s32.f32 %v618
        %v635 = vcvt.s32.f32 %v619
        %v636 = vcvt.s32.f32 %v620
        %v637 = vcvt.s32.f32 %v621
        %v638 = vcvt.s32.f32 %v622
        %v639 = vcvt.s32.f32 %v623
        %v640 = vcvt.s32.f32 %v624
        %v641 = vcvt.s32.f32 %v625
        %v642 = vcvt.s32.f32 %v626
        %v643 = vcvt.s32.f32 %v627
        %v644 = vcvt.s32.f32 %v628
        %v645 = vcvt.s32.f32 %v629
        %v646 = vcvt.s32.f32 %v630
        %v647 = vmul.f32 %v255, %v504
        %v648 = vmul.f32 %v256, %v505
        %v649 = vmul.f32 %v257, %v507
        %v650 = vmul.f32 %v258, %v508
        %v651 = vmul.f32 %v259, %v510
        %v652 = vmul.f32 %v260, %v511
        %v653 = vmul.f32 %v261, %v513
        %v654 = vmul.f32 %v262, %v514
        %v655 = vmul.f32 %v263, %v516
        %v656 = vmul.f32 %v264, %v517
        %v657 = vmul.f32 %v265, %v519
        %v658 = vmul.f32 %v266, %v520
        %v659 = vmul.f32 %v267, %v522
        %v660 = vmul.f32 %v268, %v523
        %v661 = vmul.f32 %v269, %v525
        %v662 = vmul.f32 %v270, %v526
        %v663 = vmul.f32 %v647, %v631
        %v664 = vmul.f32 %v648, %v632
        %v665 = vmul.f32 %v649, %v633
        %v666 = vmul.f32 %v650, %v634
        %v667 = vmul.f32 %v651, %v635
        %v668 = vmul.f32 %v652, %v636
        %v669 = vmul.f32 %v653, %v637
        %v670 = vmul.f32 %v654, %v638
        %v671 = vmul.f32 %v655, %v639
        %v672 = vmul.f32 %v656, %v640
        %v673 = vmul.f32 %v657, %v641
        %v674 = vmul.f32 %v658, %v642
        %v675 = vmul.f32 %v659, %v643
        %v676 = vmul.f32 %v660, %v644
        %v677 = vmul.f32 %v661, %v645
        %v678 = vmul.f32 %v662, %v646
        %v679 = vld [vmem:[%s251] sm:$0xff]
        %v680 = vld [vmem:[%s251 + $0x8] sm:$0xff]
        %v681 = vld [vmem:[%s251 + $0x10] sm:$0xff]
        %v682 = vld [vmem:[%s251 + $0x18] sm:$0xff]
        %v683 = vld [vmem:[%s251 + $0x20] sm:$0xff]
        %v684 = vld [vmem:[%s251 + $0x28] sm:$0xff]
        %v685 = vld [vmem:[%s251 + $0x30] sm:$0xff]
        %v686 = vld [vmem:[%s251 + $0x38] sm:$0xff]
        %v687 = vld [vmem:[%s251 + $0x40] sm:$0xff]
        %v688 = vld [vmem:[%s251 + $0x48] sm:$0xff]
        %v689 = vld [vmem:[%s251 + $0x50] sm:$0xff]
        %v690 = vld [vmem:[%s251 + $0x58] sm:$0xff]
        %v691 = vld [vmem:[%s251 + $0x60] sm:$0xff]
        %v692 = vld [vmem:[%s251 + $0x68] sm:$0xff]
        %v693 = vld [vmem:[%s251 + $0x70] sm:$0xff]
        %v694 = vld [vmem:[%s251 + $0x78] sm:$0xff]
        %v695 = vld [vmem:[%s251 + $0x80] sm:$0xff]
        %v696 = vld [vmem:[%s251 + $0x88] sm:$0xff]
        %v697 = vld [vmem:[%s251 + $0x90] sm:$0xff]
        %v698 = vld [vmem:[%s251 + $0x98] sm:$0xff]
        %v699 = vld [vmem:[%s251 + $0xa0] sm:$0xff]
        %v700 = vld [vmem:[%s251 + $0xa8] sm:$0xff]
        %v701 = vld [vmem:[%s251 + $0xb0] sm:$0xff]
        %v702 = vld [vmem:[%s251 + $0xb8] sm:$0xff]
        %v703 = vld [vmem:[%s251 + $0xc0] sm:$0xff]
        %v704 = vld [vmem:[%s251 + $0xc8] sm:$0xff]
        %v705 = vld [vmem:[%s251 + $0xd0] sm:$0xff]
        %v706 = vld [vmem:[%s251 + $0xd8] sm:$0xff]
        %v707 = vld [vmem:[%s251 + $0xe0] sm:$0xff]
        %v708 = vld [vmem:[%s251 + $0xe8] sm:$0xff]
        %v709 = vld [vmem:[%s251 + $0xf0] sm:$0xff]
        %v710 = vld [vmem:[%s251 + $0xf8] sm:$0xff]
        %v711 = vld [vmem:[%s251 + $0x100] sm:$0xff]
        %v712 = vld [vmem:[%s251 + $0x108] sm:$0xff]
        %v713 = vld [vmem:[%s251 + $0x110] sm:$0xff]
        %v714 = vld [vmem:[%s251 + $0x118] sm:$0xff]
        %v715 = vld [vmem:[%s251 + $0x120] sm:$0xff]
        %v716 = vld [vmem:[%s251 + $0x128] sm:$0xff]
        %v717 = vld [vmem:[%s251 + $0x130] sm:$0xff]
        %v718 = vld [vmem:[%s251 + $0x138] sm:$0xff]
        %v719 = vadd.s32 %v684, 16
        %v720 = vadd.s32 %v685, 16
        %v721 = vadd.s32 %v686, 16
        %v722 = vadd.s32 %v687, 16
        %v723 = vadd.s32 %v688, 16
        %v724 = vadd.s32 %v689, 32
        %v725 = vadd.s32 %v690, 32
        %v726 = vadd.s32 %v691, 32
        %v727 = vadd.s32 %v692, 32
        %v728 = vadd.s32 %v693, 32
        %v729 = vadd.s32 %v694, 48
        %v730 = vadd.s32 %v695, 48
        %v731 = vadd.s32 %v696, 48
        %v732 = vadd.s32 %v697, 48
        %v733 = vadd.s32 %v698, 48
        %v734 = vadd.s32 %v699, 64
        %v735 = vadd.s32 %v700, 64
        %v736 = vadd.s32 %v701, 64
        %v737 = vadd.s32 %v702, 64
        %v738 = vadd.s32 %v703, 64
        %v739 = vadd.s32 %v704, 80
        %v740 = vadd.s32 %v705, 80
        %v741 = vadd.s32 %v706, 80
        %v742 = vadd.s32 %v707, 80
        %v743 = vadd.s32 %v708, 80
        %v744 = vadd.s32 %v709, 96
        %v745 = vadd.s32 %v710, 96
        %v746 = vadd.s32 %v711, 96
        %v747 = vadd.s32 %v712, 96
        %v748 = vadd.s32 %v713, 96
        %v749 = vadd.s32 %v714, 112
        %v750 = vadd.s32 %v715, 112
        %v751 = vadd.s32 %v716, 112
        %v752 = vadd.s32 %v717, 112
        %v753 = vadd.s32 %v718, 112
        %v754 = vlaneseq
        %v755 = vand.u32 %v754, 127
        %756 = vset.pattern.permute.xlu0 0
        %757 = vperm.xlu0 %756, %v679
        %v758 = vpop.permute.xlu0 %757
        %759 = vset.pattern.permute.xlu0 0
        %760 = vperm.xlu0 %759, %v680
        %v761 = vpop.permute.xlu0 %760
        %762 = vset.pattern.permute.xlu0 0
        %763 = vperm.xlu0 %762, %v681
        %v764 = vpop.permute.xlu0 %763
        %765 = vset.pattern.permute.xlu0 0
        %766 = vperm.xlu0 %765, %v682
        %v767 = vpop.permute.xlu0 %766
        %768 = vset.pattern.permute.xlu0 0
        %769 = vperm.xlu0 %768, %v683
        %v770 = vpop.permute.xlu0 %769
        %771 = vset.pattern.permute.xlu0 0
        %772 = vperm.xlu0 %771, %v719
        %v773 = vpop.permute.xlu0 %772
        %774 = vset.pattern.permute.xlu0 0
        %775 = vperm.xlu0 %774, %v720
        %v776 = vpop.permute.xlu0 %775
        %777 = vset.pattern.permute.xlu0 0
        %778 = vperm.xlu0 %777, %v721
        %v779 = vpop.permute.xlu0 %778
        %780 = vset.pattern.permute.xlu0 0
        %781 = vperm.xlu0 %780, %v722
        %v782 = vpop.permute.xlu0 %781
        %783 = vset.pattern.permute.xlu0 0
        %784 = vperm.xlu0 %783, %v723
        %v785 = vpop.permute.xlu0 %784
        %786 = vset.pattern.permute.xlu0 0
        %787 = vperm.xlu0 %786, %v724
        %v788 = vpop.permute.xlu0 %787
        %789 = vset.pattern.permute.xlu0 0
        %790 = vperm.xlu0 %789, %v725
        %v791 = vpop.permute.xlu0 %790
        %792 = vset.pattern.permute.xlu0 0
        %793 = vperm.xlu0 %792, %v726
        %v794 = vpop.permute.xlu0 %793
        %795 = vset.pattern.permute.xlu0 0
        %796 = vperm.xlu0 %795, %v727
        %v797 = vpop.permute.xlu0 %796
        %798 = vset.pattern.permute.xlu0 0
        %799 = vperm.xlu0 %798, %v728
        %v800 = vpop.permute.xlu0 %799
        %801 = vset.pattern.permute.xlu0 0
        %802 = vperm.xlu0 %801, %v729
        %v803 = vpop.permute.xlu0 %802
        %804 = vset.pattern.permute.xlu0 0
        %805 = vperm.xlu0 %804, %v730
        %v806 = vpop.permute.xlu0 %805
        %807 = vset.pattern.permute.xlu0 0
        %808 = vperm.xlu0 %807, %v731
        %v809 = vpop.permute.xlu0 %808
        %810 = vset.pattern.permute.xlu0 0
        %811 = vperm.xlu0 %810, %v732
        %v812 = vpop.permute.xlu0 %811
        %813 = vset.pattern.permute.xlu0 0
        %814 = vperm.xlu0 %813, %v733
        %v815 = vpop.permute.xlu0 %814
        %816 = vset.pattern.permute.xlu0 0
        %817 = vperm.xlu0 %816, %v734
        %v818 = vpop.permute.xlu0 %817
        %819 = vset.pattern.permute.xlu0 0
        %820 = vperm.xlu0 %819, %v735
        %v821 = vpop.permute.xlu0 %820
        %822 = vset.pattern.permute.xlu0 0
        %823 = vperm.xlu0 %822, %v736
        %v824 = vpop.permute.xlu0 %823
        %825 = vset.pattern.permute.xlu0 0
        %826 = vperm.xlu0 %825, %v737
        %v827 = vpop.permute.xlu0 %826
        %828 = vset.pattern.permute.xlu0 0
        %829 = vperm.xlu0 %828, %v738
        %v830 = vpop.permute.xlu0 %829
        %831 = vset.pattern.permute.xlu0 0
        %832 = vperm.xlu0 %831, %v739
        %v833 = vpop.permute.xlu0 %832
        %834 = vset.pattern.permute.xlu0 0
        %835 = vperm.xlu0 %834, %v740
        %v836 = vpop.permute.xlu0 %835
        %837 = vset.pattern.permute.xlu0 0
        %838 = vperm.xlu0 %837, %v741
        %v839 = vpop.permute.xlu0 %838
        %840 = vset.pattern.permute.xlu0 0
        %841 = vperm.xlu0 %840, %v742
        %v842 = vpop.permute.xlu0 %841
        %843 = vset.pattern.permute.xlu0 0
        %844 = vperm.xlu0 %843, %v743
        %v845 = vpop.permute.xlu0 %844
        %846 = vset.pattern.permute.xlu0 0
        %847 = vperm.xlu0 %846, %v744
        %v848 = vpop.permute.xlu0 %847
        %849 = vset.pattern.permute.xlu0 0
        %850 = vperm.xlu0 %849, %v745
        %v851 = vpop.permute.xlu0 %850
        %852 = vset.pattern.permute.xlu0 0
        %853 = vperm.xlu0 %852, %v746
        %v854 = vpop.permute.xlu0 %853
        %855 = vset.pattern.permute.xlu0 0
        %856 = vperm.xlu0 %855, %v747
        %v857 = vpop.permute.xlu0 %856
        %858 = vset.pattern.permute.xlu0 0
        %859 = vperm.xlu0 %858, %v748
        %v860 = vpop.permute.xlu0 %859
        %861 = vset.pattern.permute.xlu0 0
        %862 = vperm.xlu0 %861, %v749
        %v863 = vpop.permute.xlu0 %862
        %864 = vset.pattern.permute.xlu0 0
        %865 = vperm.xlu0 %864, %v750
        %v866 = vpop.permute.xlu0 %865
        %867 = vset.pattern.permute.xlu0 0
        %868 = vperm.xlu0 %867, %v751
        %v869 = vpop.permute.xlu0 %868
        %870 = vset.pattern.permute.xlu0 0
        %871 = vperm.xlu0 %870, %v752
        %v872 = vpop.permute.xlu0 %871
        %873 = vset.pattern.permute.xlu0 0
        %874 = vperm.xlu0 %873, %v753
        %v875 = vpop.permute.xlu0 %874
        %vm876 = vcmp.eq.s32.totalorder %v758, %v755
        %vm877 = vcmp.eq.s32.totalorder %v761, %v755
        %vm878 = vcmp.eq.s32.totalorder %v764, %v755
        %vm879 = vcmp.eq.s32.totalorder %v767, %v755
        %vm880 = vcmp.eq.s32.totalorder %v770, %v755
        %vm881 = vcmp.eq.s32.totalorder %v773, %v755
        %vm882 = vcmp.eq.s32.totalorder %v776, %v755
        %vm883 = vcmp.eq.s32.totalorder %v779, %v755
        %vm884 = vcmp.eq.s32.totalorder %v782, %v755
        %vm885 = vcmp.eq.s32.totalorder %v785, %v755
        %vm886 = vcmp.eq.s32.totalorder %v788, %v755
        %vm887 = vcmp.eq.s32.totalorder %v791, %v755
        %vm888 = vcmp.eq.s32.totalorder %v794, %v755
        %vm889 = vcmp.eq.s32.totalorder %v797, %v755
        %vm890 = vcmp.eq.s32.totalorder %v800, %v755
        %vm891 = vcmp.eq.s32.totalorder %v803, %v755
        %vm892 = vcmp.eq.s32.totalorder %v806, %v755
        %vm893 = vcmp.eq.s32.totalorder %v809, %v755
        %vm894 = vcmp.eq.s32.totalorder %v812, %v755
        %vm895 = vcmp.eq.s32.totalorder %v815, %v755
        %vm896 = vcmp.eq.s32.totalorder %v818, %v755
        %vm897 = vcmp.eq.s32.totalorder %v821, %v755
        %vm898 = vcmp.eq.s32.totalorder %v824, %v755
        %vm899 = vcmp.eq.s32.totalorder %v827, %v755
        %vm900 = vcmp.eq.s32.totalorder %v830, %v755
        %vm901 = vcmp.eq.s32.totalorder %v833, %v755
        %vm902 = vcmp.eq.s32.totalorder %v836, %v755
        %vm903 = vcmp.eq.s32.totalorder %v839, %v755
        %vm904 = vcmp.eq.s32.totalorder %v842, %v755
        %vm905 = vcmp.eq.s32.totalorder %v845, %v755
        %vm906 = vcmp.eq.s32.totalorder %v848, %v755
        %vm907 = vcmp.eq.s32.totalorder %v851, %v755
        %vm908 = vcmp.eq.s32.totalorder %v854, %v755
        %vm909 = vcmp.eq.s32.totalorder %v857, %v755
        %vm910 = vcmp.eq.s32.totalorder %v860, %v755
        %vm911 = vcmp.eq.s32.totalorder %v863, %v755
        %vm912 = vcmp.eq.s32.totalorder %v866, %v755
        %vm913 = vcmp.eq.s32.totalorder %v869, %v755
        %vm914 = vcmp.eq.s32.totalorder %v872, %v755
        %vm915 = vcmp.eq.s32.totalorder %v875, %v755
        %v916 = vsel %vm876, 1, 0
        %v917 = vsel %vm877, 1, 0
        %v918 = vsel %vm878, 1, 0
        %v919 = vsel %vm879, 1, 0
        %v920 = vsel %vm880, 1, 0
        %v921 = vsel %vm881, 1, 0
        %v922 = vsel %vm882, 1, 0
        %v923 = vsel %vm883, 1, 0
        %v924 = vsel %vm884, 1, 0
        %v925 = vsel %vm885, 1, 0
        %v926 = vsel %vm886, 1, 0
        %v927 = vsel %vm887, 1, 0
        %v928 = vsel %vm888, 1, 0
        %v929 = vsel %vm889, 1, 0
        %v930 = vsel %vm890, 1, 0
        %v931 = vsel %vm891, 1, 0
        %v932 = vsel %vm892, 1, 0
        %v933 = vsel %vm893, 1, 0
        %v934 = vsel %vm894, 1, 0
        %v935 = vsel %vm895, 1, 0
        %v936 = vsel %vm896, 1, 0
        %v937 = vsel %vm897, 1, 0
        %v938 = vsel %vm898, 1, 0
        %v939 = vsel %vm899, 1, 0
        %v940 = vsel %vm900, 1, 0
        %v941 = vsel %vm901, 1, 0
        %v942 = vsel %vm902, 1, 0
        %v943 = vsel %vm903, 1, 0
        %v944 = vsel %vm904, 1, 0
        %v945 = vsel %vm905, 1, 0
        %v946 = vsel %vm906, 1, 0
        %v947 = vsel %vm907, 1, 0
        %v948 = vsel %vm908, 1, 0
        %v949 = vsel %vm909, 1, 0
        %v950 = vsel %vm910, 1, 0
        %v951 = vsel %vm911, 1, 0
        %v952 = vsel %vm912, 1, 0
        %v953 = vsel %vm913, 1, 0
        %v954 = vsel %vm914, 1, 0
        %v955 = vsel %vm915, 1, 0
        %v956 = vcvt.s32.f32 %v916
        %v957 = vcvt.s32.f32 %v917
        %v958 = vcvt.s32.f32 %v918
        %v959 = vcvt.s32.f32 %v919
        %v960 = vcvt.s32.f32 %v920
        %v961 = vcvt.s32.f32 %v921
        %v962 = vcvt.s32.f32 %v922
        %v963 = vcvt.s32.f32 %v923
        %v964 = vcvt.s32.f32 %v924
        %v965 = vcvt.s32.f32 %v925
        %v966 = vcvt.s32.f32 %v926
        %v967 = vcvt.s32.f32 %v927
        %v968 = vcvt.s32.f32 %v928
        %v969 = vcvt.s32.f32 %v929
        %v970 = vcvt.s32.f32 %v930
        %v971 = vcvt.s32.f32 %v931
        %v972 = vcvt.s32.f32 %v932
        %v973 = vcvt.s32.f32 %v933
        %v974 = vcvt.s32.f32 %v934
        %v975 = vcvt.s32.f32 %v935
        %v976 = vcvt.s32.f32 %v936
        %v977 = vcvt.s32.f32 %v937
        %v978 = vcvt.s32.f32 %v938
        %v979 = vcvt.s32.f32 %v939
        %v980 = vcvt.s32.f32 %v940
        %v981 = vcvt.s32.f32 %v941
        %v982 = vcvt.s32.f32 %v942
        %v983 = vcvt.s32.f32 %v943
        %v984 = vcvt.s32.f32 %v944
        %v985 = vcvt.s32.f32 %v945
        %v986 = vcvt.s32.f32 %v946
        %v987 = vcvt.s32.f32 %v947
        %v988 = vcvt.s32.f32 %v948
        %v989 = vcvt.s32.f32 %v949
        %v990 = vcvt.s32.f32 %v950
        %v991 = vcvt.s32.f32 %v951
        %v992 = vcvt.s32.f32 %v952
        %v993 = vcvt.s32.f32 %v953
        %v994 = vcvt.s32.f32 %v954
        %v995 = vcvt.s32.f32 %v955
        %v996 = vpack.c.bf16 %v957, %v956
        %v997 = vpack.c.bf16 %v959, %v958
        %v998 = vpack.c.bf16 %v960, %v960
        %v999 = vpack.c.bf16 %v962, %v961
        %v1000 = vpack.c.bf16 %v964, %v963
        %v1001 = vpack.c.bf16 %v965, %v965
        %v1002 = vpack.c.bf16 %v967, %v966
        %v1003 = vpack.c.bf16 %v969, %v968
        %v1004 = vpack.c.bf16 %v970, %v970
        %v1005 = vpack.c.bf16 %v972, %v971
        %v1006 = vpack.c.bf16 %v974, %v973
        %v1007 = vpack.c.bf16 %v975, %v975
        %v1008 = vpack.c.bf16 %v977, %v976
        %v1009 = vpack.c.bf16 %v979, %v978
        %v1010 = vpack.c.bf16 %v980, %v980
        %v1011 = vpack.c.bf16 %v982, %v981
        %v1012 = vpack.c.bf16 %v984, %v983
        %v1013 = vpack.c.bf16 %v985, %v985
        %v1014 = vpack.c.bf16 %v987, %v986
        %v1015 = vpack.c.bf16 %v989, %v988
        %v1016 = vpack.c.bf16 %v990, %v990
        %v1017 = vpack.c.bf16 %v992, %v991
        %v1018 = vpack.c.bf16 %v994, %v993
        %v1019 = vpack.c.bf16 %v995, %v995
        %v1044 = vunpack.c.l.b16 %v996
        %v1045 = vunpack.c.h.b16 %v996
        %v1046 = vunpack.c.l.b16 %v997
        %v1047 = vunpack.c.h.b16 %v997
        %v1048 = vunpack.c.l.b16 %v998
        %v1049 = vunpack.c.l.b16 %v999
        %v1050 = vunpack.c.h.b16 %v999
        %v1051 = vunpack.c.l.b16 %v1000
        %v1052 = vunpack.c.h.b16 %v1000
        %v1053 = vunpack.c.l.b16 %v1001
        %v1054 = vunpack.c.l.b16 %v1002
        %v1055 = vunpack.c.h.b16 %v1002
        %v1056 = vunpack.c.l.b16 %v1003
        %v1057 = vunpack.c.h.b16 %v1003
        %v1058 = vunpack.c.l.b16 %v1004
        %v1059 = vunpack.c.l.b16 %v1005
        %v1060 = vunpack.c.h.b16 %v1005
        %v1061 = vunpack.c.l.b16 %v1006
        %v1062 = vunpack.c.h.b16 %v1006
        %v1063 = vunpack.c.l.b16 %v1007
        %v1064 = vunpack.c.l.b16 %v1008
        %v1065 = vunpack.c.h.b16 %v1008
        %v1066 = vunpack.c.l.b16 %v1009
        %v1067 = vunpack.c.h.b16 %v1009
        %v1068 = vunpack.c.l.b16 %v1010
        %v1069 = vunpack.c.l.b16 %v1011
        %v1070 = vunpack.c.h.b16 %v1011
        %v1071 = vunpack.c.l.b16 %v1012
        %v1072 = vunpack.c.h.b16 %v1012
        %v1073 = vunpack.c.l.b16 %v1013
        %v1074 = vunpack.c.l.b16 %v1014
        %v1075 = vunpack.c.h.b16 %v1014
        %v1076 = vunpack.c.l.b16 %v1015
        %v1077 = vunpack.c.h.b16 %v1015
        %v1078 = vunpack.c.l.b16 %v1016
        %v1079 = vunpack.c.l.b16 %v1017
        %v1080 = vunpack.c.h.b16 %v1017
        %v1081 = vunpack.c.l.b16 %v1018
        %v1082 = vunpack.c.h.b16 %v1018
        %v1083 = vunpack.c.l.b16 %v1019
        %1084 = vset.pattern.permute.xlu0 1
        %1085 = vperm.xlu0 %1084, %v679
        %v1086 = vpop.permute.xlu0 %1085
        %1087 = vset.pattern.permute.xlu0 1
        %1088 = vperm.xlu0 %1087, %v680
        %v1089 = vpop.permute.xlu0 %1088
        %1090 = vset.pattern.permute.xlu0 1
        %1091 = vperm.xlu0 %1090, %v681
        %v1092 = vpop.permute.xlu0 %1091
        %1093 = vset.pattern.permute.xlu0 1
        %1094 = vperm.xlu0 %1093, %v682
        %v1095 = vpop.permute.xlu0 %1094
        %1096 = vset.pattern.permute.xlu0 1
        %1097 = vperm.xlu0 %1096, %v683
        %v1098 = vpop.permute.xlu0 %1097
        %1099 = vset.pattern.permute.xlu0 1
        %1100 = vperm.xlu0 %1099, %v719
        %v1101 = vpop.permute.xlu0 %1100
        %1102 = vset.pattern.permute.xlu0 1
        %1103 = vperm.xlu0 %1102, %v720
        %v1104 = vpop.permute.xlu0 %1103
        %1105 = vset.pattern.permute.xlu0 1
        %1106 = vperm.xlu0 %1105, %v721
        %v1107 = vpop.permute.xlu0 %1106
        %1108 = vset.pattern.permute.xlu0 1
        %1109 = vperm.xlu0 %1108, %v722
        %v1110 = vpop.permute.xlu0 %1109
        %1111 = vset.pattern.permute.xlu0 1
        %1112 = vperm.xlu0 %1111, %v723
        %v1113 = vpop.permute.xlu0 %1112
        %1114 = vset.pattern.permute.xlu0 1
        %1115 = vperm.xlu0 %1114, %v724
        %v1116 = vpop.permute.xlu0 %1115
        %1117 = vset.pattern.permute.xlu0 1
        %1118 = vperm.xlu0 %1117, %v725
        %v1119 = vpop.permute.xlu0 %1118
        %1120 = vset.pattern.permute.xlu0 1
        %1121 = vperm.xlu0 %1120, %v726
        %v1122 = vpop.permute.xlu0 %1121
        %1123 = vset.pattern.permute.xlu0 1
        %1124 = vperm.xlu0 %1123, %v727
        %v1125 = vpop.permute.xlu0 %1124
        %1126 = vset.pattern.permute.xlu0 1
        %1127 = vperm.xlu0 %1126, %v728
        %v1128 = vpop.permute.xlu0 %1127
        %1129 = vset.pattern.permute.xlu0 1
        %1130 = vperm.xlu0 %1129, %v729
        %v1131 = vpop.permute.xlu0 %1130
        %1132 = vset.pattern.permute.xlu0 1
        %1133 = vperm.xlu0 %1132, %v730
        %v1134 = vpop.permute.xlu0 %1133
        %1135 = vset.pattern.permute.xlu0 1
        %1136 = vperm.xlu0 %1135, %v731
        %v1137 = vpop.permute.xlu0 %1136
        %1138 = vset.pattern.permute.xlu0 1
        %1139 = vperm.xlu0 %1138, %v732
        %v1140 = vpop.permute.xlu0 %1139
        %1141 = vset.pattern.permute.xlu0 1
        %1142 = vperm.xlu0 %1141, %v733
        %v1143 = vpop.permute.xlu0 %1142
        %1144 = vset.pattern.permute.xlu0 1
        %1145 = vperm.xlu0 %1144, %v734
        %v1146 = vpop.permute.xlu0 %1145
        %1147 = vset.pattern.permute.xlu0 1
        %1148 = vperm.xlu0 %1147, %v735
        %v1149 = vpop.permute.xlu0 %1148
        %1150 = vset.pattern.permute.xlu0 1
        %1151 = vperm.xlu0 %1150, %v736
        %v1152 = vpop.permute.xlu0 %1151
        %1153 = vset.pattern.permute.xlu0 1
        %1154 = vperm.xlu0 %1153, %v737
        %v1155 = vpop.permute.xlu0 %1154
        %1156 = vset.pattern.permute.xlu0 1
        %1157 = vperm.xlu0 %1156, %v738
        %v1158 = vpop.permute.xlu0 %1157
        %1159 = vset.pattern.permute.xlu0 1
        %1160 = vperm.xlu0 %1159, %v739
        %v1161 = vpop.permute.xlu0 %1160
        %1162 = vset.pattern.permute.xlu0 1
        %1163 = vperm.xlu0 %1162, %v740
        %v1164 = vpop.permute.xlu0 %1163
        %1165 = vset.pattern.permute.xlu0 1
        %1166 = vperm.xlu0 %1165, %v741
        %v1167 = vpop.permute.xlu0 %1166
        %1168 = vset.pattern.permute.xlu0 1
        %1169 = vperm.xlu0 %1168, %v742
        %v1170 = vpop.permute.xlu0 %1169
        %1171 = vset.pattern.permute.xlu0 1
        %1172 = vperm.xlu0 %1171, %v743
        %v1173 = vpop.permute.xlu0 %1172
        %1174 = vset.pattern.permute.xlu0 1
        %1175 = vperm.xlu0 %1174, %v744
        %v1176 = vpop.permute.xlu0 %1175
        %1177 = vset.pattern.permute.xlu0 1
        %1178 = vperm.xlu0 %1177, %v745
        %v1179 = vpop.permute.xlu0 %1178
        %1180 = vset.pattern.permute.xlu0 1
        %1181 = vperm.xlu0 %1180, %v746
        %v1182 = vpop.permute.xlu0 %1181
        %1183 = vset.pattern.permute.xlu0 1
        %1184 = vperm.xlu0 %1183, %v747
        %v1185 = vpop.permute.xlu0 %1184
        %1186 = vset.pattern.permute.xlu0 1
        %1187 = vperm.xlu0 %1186, %v748
        %v1188 = vpop.permute.xlu0 %1187
        %1189 = vset.pattern.permute.xlu0 1
        %1190 = vperm.xlu0 %1189, %v749
        %v1191 = vpop.permute.xlu0 %1190
        %1192 = vset.pattern.permute.xlu0 1
        %1193 = vperm.xlu0 %1192, %v750
        %v1194 = vpop.permute.xlu0 %1193
        %1195 = vset.pattern.permute.xlu0 1
        %1196 = vperm.xlu0 %1195, %v751
        %v1197 = vpop.permute.xlu0 %1196
        %1198 = vset.pattern.permute.xlu0 1
        %1199 = vperm.xlu0 %1198, %v752
        %v1200 = vpop.permute.xlu0 %1199
        %1201 = vset.pattern.permute.xlu0 1
        %1202 = vperm.xlu0 %1201, %v753
        %v1203 = vpop.permute.xlu0 %1202
        %vm1204 = vcmp.eq.s32.totalorder %v1086, %v755
        %vm1205 = vcmp.eq.s32.totalorder %v1089, %v755
        %vm1206 = vcmp.eq.s32.totalorder %v1092, %v755
        %vm1207 = vcmp.eq.s32.totalorder %v1095, %v755
        %vm1208 = vcmp.eq.s32.totalorder %v1098, %v755
        %vm1209 = vcmp.eq.s32.totalorder %v1101, %v755
        %vm1210 = vcmp.eq.s32.totalorder %v1104, %v755
        %vm1211 = vcmp.eq.s32.totalorder %v1107, %v755
        %vm1212 = vcmp.eq.s32.totalorder %v1110, %v755
        %vm1213 = vcmp.eq.s32.totalorder %v1113, %v755
        %vm1214 = vcmp.eq.s32.totalorder %v1116, %v755
        %vm1215 = vcmp.eq.s32.totalorder %v1119, %v755
        %vm1216 = vcmp.eq.s32.totalorder %v1122, %v755
        %vm1217 = vcmp.eq.s32.totalorder %v1125, %v755
        %vm1218 = vcmp.eq.s32.totalorder %v1128, %v755
        %vm1219 = vcmp.eq.s32.totalorder %v1131, %v755
        %vm1220 = vcmp.eq.s32.totalorder %v1134, %v755
        %vm1221 = vcmp.eq.s32.totalorder %v1137, %v755
        %vm1222 = vcmp.eq.s32.totalorder %v1140, %v755
        %vm1223 = vcmp.eq.s32.totalorder %v1143, %v755
        %vm1224 = vcmp.eq.s32.totalorder %v1146, %v755
        %vm1225 = vcmp.eq.s32.totalorder %v1149, %v755
        %vm1226 = vcmp.eq.s32.totalorder %v1152, %v755
        %vm1227 = vcmp.eq.s32.totalorder %v1155, %v755
        %vm1228 = vcmp.eq.s32.totalorder %v1158, %v755
        %vm1229 = vcmp.eq.s32.totalorder %v1161, %v755
        %vm1230 = vcmp.eq.s32.totalorder %v1164, %v755
        %vm1231 = vcmp.eq.s32.totalorder %v1167, %v755
        %vm1232 = vcmp.eq.s32.totalorder %v1170, %v755
        %vm1233 = vcmp.eq.s32.totalorder %v1173, %v755
        %vm1234 = vcmp.eq.s32.totalorder %v1176, %v755
        %vm1235 = vcmp.eq.s32.totalorder %v1179, %v755
        %vm1236 = vcmp.eq.s32.totalorder %v1182, %v755
        %vm1237 = vcmp.eq.s32.totalorder %v1185, %v755
        %vm1238 = vcmp.eq.s32.totalorder %v1188, %v755
        %vm1239 = vcmp.eq.s32.totalorder %v1191, %v755
        %vm1240 = vcmp.eq.s32.totalorder %v1194, %v755
        %vm1241 = vcmp.eq.s32.totalorder %v1197, %v755
        %vm1242 = vcmp.eq.s32.totalorder %v1200, %v755
        %vm1243 = vcmp.eq.s32.totalorder %v1203, %v755
        %v1244 = vsel %vm1204, 1, 0
        %v1245 = vsel %vm1205, 1, 0
        %v1246 = vsel %vm1206, 1, 0
        %v1247 = vsel %vm1207, 1, 0
        %v1248 = vsel %vm1208, 1, 0
        %v1249 = vsel %vm1209, 1, 0
        %v1250 = vsel %vm1210, 1, 0
        %v1251 = vsel %vm1211, 1, 0
        %v1252 = vsel %vm1212, 1, 0
        %v1253 = vsel %vm1213, 1, 0
        %v1254 = vsel %vm1214, 1, 0
        %v1255 = vsel %vm1215, 1, 0
        %v1256 = vsel %vm1216, 1, 0
        %v1257 = vsel %vm1217, 1, 0
        %v1258 = vsel %vm1218, 1, 0
        %v1259 = vsel %vm1219, 1, 0
        %v1260 = vsel %vm1220, 1, 0
        %v1261 = vsel %vm1221, 1, 0
        %v1262 = vsel %vm1222, 1, 0
        %v1263 = vsel %vm1223, 1, 0
        %v1264 = vsel %vm1224, 1, 0
        %v1265 = vsel %vm1225, 1, 0
        %v1266 = vsel %vm1226, 1, 0
        %v1267 = vsel %vm1227, 1, 0
        %v1268 = vsel %vm1228, 1, 0
        %v1269 = vsel %vm1229, 1, 0
        %v1270 = vsel %vm1230, 1, 0
        %v1271 = vsel %vm1231, 1, 0
        %v1272 = vsel %vm1232, 1, 0
        %v1273 = vsel %vm1233, 1, 0
        %v1274 = vsel %vm1234, 1, 0
        %v1275 = vsel %vm1235, 1, 0
        %v1276 = vsel %vm1236, 1, 0
        %v1277 = vsel %vm1237, 1, 0
        %v1278 = vsel %vm1238, 1, 0
        %v1279 = vsel %vm1239, 1, 0
        %v1280 = vsel %vm1240, 1, 0
        %v1281 = vsel %vm1241, 1, 0
        %v1282 = vsel %vm1242, 1, 0
        %v1283 = vsel %vm1243, 1, 0
        %v1284 = vcvt.s32.f32 %v1244
        %v1285 = vcvt.s32.f32 %v1245
        %v1286 = vcvt.s32.f32 %v1246
        %v1287 = vcvt.s32.f32 %v1247
        %v1288 = vcvt.s32.f32 %v1248
        %v1289 = vcvt.s32.f32 %v1249
        %v1290 = vcvt.s32.f32 %v1250
        %v1291 = vcvt.s32.f32 %v1251
        %v1292 = vcvt.s32.f32 %v1252
        %v1293 = vcvt.s32.f32 %v1253
        %v1294 = vcvt.s32.f32 %v1254
        %v1295 = vcvt.s32.f32 %v1255
        %v1296 = vcvt.s32.f32 %v1256
        %v1297 = vcvt.s32.f32 %v1257
        %v1298 = vcvt.s32.f32 %v1258
        %v1299 = vcvt.s32.f32 %v1259
        %v1300 = vcvt.s32.f32 %v1260
        %v1301 = vcvt.s32.f32 %v1261
        %v1302 = vcvt.s32.f32 %v1262
        %v1303 = vcvt.s32.f32 %v1263
        %v1304 = vcvt.s32.f32 %v1264
        %v1305 = vcvt.s32.f32 %v1265
        %v1306 = vcvt.s32.f32 %v1266
        %v1307 = vcvt.s32.f32 %v1267
        %v1308 = vcvt.s32.f32 %v1268
        %v1309 = vcvt.s32.f32 %v1269
        %v1310 = vcvt.s32.f32 %v1270
        %v1311 = vcvt.s32.f32 %v1271
        %v1312 = vcvt.s32.f32 %v1272
        %v1313 = vcvt.s32.f32 %v1273
        %v1314 = vcvt.s32.f32 %v1274
        %v1315 = vcvt.s32.f32 %v1275
        %v1316 = vcvt.s32.f32 %v1276
        %v1317 = vcvt.s32.f32 %v1277
        %v1318 = vcvt.s32.f32 %v1278
        %v1319 = vcvt.s32.f32 %v1279
        %v1320 = vcvt.s32.f32 %v1280
        %v1321 = vcvt.s32.f32 %v1281
        %v1322 = vcvt.s32.f32 %v1282
        %v1323 = vcvt.s32.f32 %v1283
        %v1324 = vpack.c.bf16 %v1285, %v1284
        %v1325 = vpack.c.bf16 %v1287, %v1286
        %v1326 = vpack.c.bf16 %v1288, %v1288
        %v1327 = vpack.c.bf16 %v1290, %v1289
        %v1328 = vpack.c.bf16 %v1292, %v1291
        %v1329 = vpack.c.bf16 %v1293, %v1293
        %v1330 = vpack.c.bf16 %v1295, %v1294
        %v1331 = vpack.c.bf16 %v1297, %v1296
        %v1332 = vpack.c.bf16 %v1298, %v1298
        %v1333 = vpack.c.bf16 %v1300, %v1299
        %v1334 = vpack.c.bf16 %v1302, %v1301
        %v1335 = vpack.c.bf16 %v1303, %v1303
        %v1336 = vpack.c.bf16 %v1305, %v1304
        %v1337 = vpack.c.bf16 %v1307, %v1306
        %v1338 = vpack.c.bf16 %v1308, %v1308
        %v1339 = vpack.c.bf16 %v1310, %v1309
        %v1340 = vpack.c.bf16 %v1312, %v1311
        %v1341 = vpack.c.bf16 %v1313, %v1313
        %v1342 = vpack.c.bf16 %v1315, %v1314
        %v1343 = vpack.c.bf16 %v1317, %v1316
        %v1344 = vpack.c.bf16 %v1318, %v1318
        %v1345 = vpack.c.bf16 %v1320, %v1319
        %v1346 = vpack.c.bf16 %v1322, %v1321
        %v1347 = vpack.c.bf16 %v1323, %v1323
        %v1372 = vunpack.c.l.b16 %v1324
        %v1373 = vunpack.c.h.b16 %v1324
        %v1374 = vunpack.c.l.b16 %v1325
        %v1375 = vunpack.c.h.b16 %v1325
        %v1376 = vunpack.c.l.b16 %v1326
        %v1377 = vunpack.c.l.b16 %v1327
        %v1378 = vunpack.c.h.b16 %v1327
        %v1379 = vunpack.c.l.b16 %v1328
        %v1380 = vunpack.c.h.b16 %v1328
        %v1381 = vunpack.c.l.b16 %v1329
        %v1382 = vunpack.c.l.b16 %v1330
        %v1383 = vunpack.c.h.b16 %v1330
        %v1384 = vunpack.c.l.b16 %v1331
        %v1385 = vunpack.c.h.b16 %v1331
        %v1386 = vunpack.c.l.b16 %v1332
        %v1387 = vunpack.c.l.b16 %v1333
        %v1388 = vunpack.c.h.b16 %v1333
        %v1389 = vunpack.c.l.b16 %v1334
        %v1390 = vunpack.c.h.b16 %v1334
        %v1391 = vunpack.c.l.b16 %v1335
        %v1392 = vunpack.c.l.b16 %v1336
        %v1393 = vunpack.c.h.b16 %v1336
        %v1394 = vunpack.c.l.b16 %v1337
        %v1395 = vunpack.c.h.b16 %v1337
        %v1396 = vunpack.c.l.b16 %v1338
        %v1397 = vunpack.c.l.b16 %v1339
        %v1398 = vunpack.c.h.b16 %v1339
        %v1399 = vunpack.c.l.b16 %v1340
        %v1400 = vunpack.c.h.b16 %v1340
        %v1401 = vunpack.c.l.b16 %v1341
        %v1402 = vunpack.c.l.b16 %v1342
        %v1403 = vunpack.c.h.b16 %v1342
        %v1404 = vunpack.c.l.b16 %v1343
        %v1405 = vunpack.c.h.b16 %v1343
        %v1406 = vunpack.c.l.b16 %v1344
        %v1407 = vunpack.c.l.b16 %v1345
        %v1408 = vunpack.c.h.b16 %v1345
        %v1409 = vunpack.c.l.b16 %v1346
        %v1410 = vunpack.c.h.b16 %v1346
        %v1411 = vunpack.c.l.b16 %v1347
        %v1412 = vpack.c.bf16 %v664, %v663
        %v1413 = vpack.c.bf16 %v666, %v665
        %v1414 = vpack.c.bf16 %v668, %v667
        %v1415 = vpack.c.bf16 %v670, %v669
        %v1416 = vpack.c.bf16 %v672, %v671
        %v1417 = vpack.c.bf16 %v674, %v673
        %v1418 = vpack.c.bf16 %v676, %v675
        %v1419 = vpack.c.bf16 %v678, %v677
        %v1420 = vpack.c.b16 %v1045, %v1044
        %v1421 = vpack.c.b16 %v1047, %v1046
        %v1422 = vpack.c.b16 %v1049, %v1048
        %v1423 = vpack.c.b16 %v1051, %v1050
        %v1424 = vpack.c.b16 %v1053, %v1052
        %v1425 = vpack.c.b16 %v1055, %v1054
        %v1426 = vpack.c.b16 %v1057, %v1056
        %v1427 = vpack.c.b16 %v1059, %v1058
        %v1428 = vpack.c.b16 %v1061, %v1060
        %v1429 = vpack.c.b16 %v1063, %v1062
        %v1430 = vpack.c.b16 %v1065, %v1064
        %v1431 = vpack.c.b16 %v1067, %v1066
        %v1432 = vpack.c.b16 %v1069, %v1068
        %v1433 = vpack.c.b16 %v1071, %v1070
        %v1434 = vpack.c.b16 %v1073, %v1072
        %v1435 = vpack.c.b16 %v1075, %v1074
        %v1436 = vpack.c.b16 %v1077, %v1076
        %v1437 = vpack.c.b16 %v1079, %v1078
        %v1438 = vpack.c.b16 %v1081, %v1080
        %v1439 = vpack.c.b16 %v1083, %v1082
        %1460 = vmatprep.subr.bf16.mxu0 0
        %1461 = vmatpush1.bf16.msra.mxu0 %v1412
        %1462 = vmatprep.subr.bf16.mxu0 0
        %1463 = vmatpush1.bf16.msra.mxu0 %v1413
        %1464 = vmatprep.subr.bf16.mxu0 0
        %1465 = vmatpush1.bf16.msra.mxu0 %v1414
        %1466 = vmatprep.subr.bf16.mxu0 0
        %1467 = vmatpush1.bf16.msra.mxu0 %v1415
        %1468 = vmatprep.subr.bf16.mxu0 0
        %1469 = vmatpush1.bf16.msra.mxu0 %v1416
        %1470 = vmatprep.subr.bf16.mxu0 0
        %1471 = vmatpush1.bf16.msra.mxu0 %v1417
        %1472 = vmatprep.subr.bf16.mxu0 0
        %1473 = vmatpush1.bf16.msra.mxu0 %v1418
        %1474 = vmatprep.subr.bf16.mxu0 0
        %1475 = vmatpush1.bf16.msra.mxu0 %v1419
        %1476 = vmatprep.subr.bf16.mxu0 0
        %1477 = vmatpush1.bf16.msra.mxu0 0
        %1478 = vmatprep.subr.bf16.mxu0 0
        %1479 = vmatpush1.bf16.msra.mxu0 0
        %1480 = vmatprep.subr.bf16.mxu0 0
        %1481 = vmatpush1.bf16.msra.mxu0 0
        %1482 = vmatprep.subr.bf16.mxu0 0
        %1483 = vmatpush1.bf16.msra.mxu0 0
        %1484 = vmatprep.subr.bf16.mxu0 0
        %1485 = vmatpush1.bf16.msra.mxu0 0
        %1486 = vmatprep.subr.bf16.mxu0 0
        %1487 = vmatpush1.bf16.msra.mxu0 0
        %1488 = vmatprep.subr.bf16.mxu0 0
        %1489 = vmatpush1.bf16.msra.mxu0 0
        %1490 = vmatprep.subr.bf16.mxu0 0
        %1491 = vmatpush1.bf16.msra.mxu0 0
        %1492 = vmatprep.mubr.bf16.mxu0 0
        %1493 = vmatmul.mubr.bf16.gmra.mrb[0].mxu0 %v1420
        %v1494 = vpop.f32.mrb[0].mxu0
        %v1495 = vadd.f32 0.0, %v1494
        %v1496 = vpop.f32.mrb[0].mxu0
        %v1497 = vpop.f32.mrb[0].mxu0
        %v1498 = vadd.f32 0.0, %v1497
        %v1499 = vpop.f32.mrb[0].mxu0
        %1500 = vmatprep.mubr.bf16.mxu0 0
        %1501 = vmatmul.mubr.bf16.gmra.mrb[0].mxu0 %v1421
        %v1502 = vpop.f32.mrb[0].mxu0
        %v1503 = vadd.f32 0.0, %v1502
        %v1504 = vpop.f32.mrb[0].mxu0
        %v1505 = vpop.f32.mrb[0].mxu0
        %v1506 = vadd.f32 0.0, %v1505
        %v1507 = vpop.f32.mrb[0].mxu0
        %1508 = vmatprep.mubr.bf16.mxu0 0
        %1509 = vmatmul.mubr.bf16.gmra.mrb[0].mxu0 %v1422
        %v1510 = vpop.f32.mrb[0].mxu0
        %v1511 = vadd.f32 0.0, %v1510
        %v1512 = vpop.f32.mrb[0].mxu0
        %v1513 = vpop.f32.mrb[0].mxu0
        %v1514 = vadd.f32 0.0, %v1513
        %v1515 = vpop.f32.mrb[0].mxu0
        %1516 = vmatprep.mubr.bf16.mxu0 0
        %1517 = vmatmul.mubr.bf16.gmra.mrb[0].mxu0 %v1423
        %v1518 = vpop.f32.mrb[0].mxu0
        %v1519 = vadd.f32 0.0, %v1518
        %v1520 = vpop.f32.mrb[0].mxu0
        %v1521 = vpop.f32.mrb[0].mxu0
        %v1522 = vadd.f32 0.0, %v1521
        %v1523 = vpop.f32.mrb[0].mxu0
        %1524 = vmatprep.mubr.bf16.mxu0 0
        %1525 = vmatmul.mubr.bf16.gmra.mrb[0].mxu0 %v1424
        %v1526 = vpop.f32.mrb[0].mxu0
        %v1527 = vadd.f32 0.0, %v1526
        %v1528 = vpop.f32.mrb[0].mxu0
        %v1529 = vpop.f32.mrb[0].mxu0
        %v1530 = vadd.f32 0.0, %v1529
        %v1531 = vpop.f32.mrb[0].mxu0
        %1532 = vmatprep.mubr.bf16.mxu0 0
        %1533 = vmatmul.mubr.bf16.gmra.mrb[0].mxu0 %v1425
        %v1534 = vpop.f32.mrb[0].mxu0
        %v1535 = vadd.f32 0.0, %v1534
        %v1536 = vpop.f32.mrb[0].mxu0
        %v1537 = vpop.f32.mrb[0].mxu0
        %v1538 = vadd.f32 0.0, %v1537
        %v1539 = vpop.f32.mrb[0].mxu0
        %1540 = vmatprep.mubr.bf16.mxu0 0
        %1541 = vmatmul.mubr.bf16.gmra.mrb[0].mxu0 %v1426
        %v1542 = vpop.f32.mrb[0].mxu0
        %v1543 = vadd.f32 0.0, %v1542
        %v1544 = vpop.f32.mrb[0].mxu0
        %v1545 = vpop.f32.mrb[0].mxu0
        %v1546 = vadd.f32 0.0, %v1545
        %v1547 = vpop.f32.mrb[0].mxu0
        %1548 = vmatprep.mubr.bf16.mxu0 0
        %1549 = vmatmul.mubr.bf16.gmra.mrb[0].mxu0 %v1427
        %v1550 = vpop.f32.mrb[0].mxu0
        %v1551 = vadd.f32 0.0, %v1550
        %v1552 = vpop.f32.mrb[0].mxu0
        %v1553 = vpop.f32.mrb[0].mxu0
        %v1554 = vadd.f32 0.0, %v1553
        %v1555 = vpop.f32.mrb[0].mxu0
        %1556 = vmatprep.mubr.bf16.mxu0 0
        %1557 = vmatmul.mubr.bf16.gmra.mrb[0].mxu0 %v1428
        %v1558 = vpop.f32.mrb[0].mxu0
        %v1559 = vadd.f32 0.0, %v1558
        %v1560 = vpop.f32.mrb[0].mxu0
        %v1561 = vpop.f32.mrb[0].mxu0
        %v1562 = vadd.f32 0.0, %v1561
        %v1563 = vpop.f32.mrb[0].mxu0
        %1564 = vmatprep.mubr.bf16.mxu0 0
        %1565 = vmatmul.mubr.bf16.gmra.mrb[0].mxu0 %v1429
        %v1566 = vpop.f32.mrb[0].mxu0
        %v1567 = vadd.f32 0.0, %v1566
        %v1568 = vpop.f32.mrb[0].mxu0
        %v1569 = vpop.f32.mrb[0].mxu0
        %v1570 = vadd.f32 0.0, %v1569
        %v1571 = vpop.f32.mrb[0].mxu0
        %1572 = vmatprep.mubr.bf16.mxu0 0
        %1573 = vmatmul.mubr.bf16.gmra.mrb[0].mxu0 %v1430
        %v1574 = vpop.f32.mrb[0].mxu0
        %v1575 = vadd.f32 0.0, %v1574
        %v1576 = vpop.f32.mrb[0].mxu0
        %v1577 = vpop.f32.mrb[0].mxu0
        %v1578 = vadd.f32 0.0, %v1577
        %v1579 = vpop.f32.mrb[0].mxu0
        %1580 = vmatprep.mubr.bf16.mxu0 0
        %1581 = vmatmul.mubr.bf16.gmra.mrb[0].mxu0 %v1431
        %v1582 = vpop.f32.mrb[0].mxu0
        %v1583 = vadd.f32 0.0, %v1582
        %v1584 = vpop.f32.mrb[0].mxu0
        %v1585 = vpop.f32.mrb[0].mxu0
        %v1586 = vadd.f32 0.0, %v1585
        %v1587 = vpop.f32.mrb[0].mxu0
        %1588 = vmatprep.mubr.bf16.mxu0 0
        %1589 = vmatmul.mubr.bf16.gmra.mrb[0].mxu0 %v1432
        %v1590 = vpop.f32.mrb[0].mxu0
        %v1591 = vadd.f32 0.0, %v1590
        %v1592 = vpop.f32.mrb[0].mxu0
        %v1593 = vpop.f32.mrb[0].mxu0
        %v1594 = vadd.f32 0.0, %v1593
        %v1595 = vpop.f32.mrb[0].mxu0
        %1596 = vmatprep.mubr.bf16.mxu0 0
        %1597 = vmatmul.mubr.bf16.gmra.mrb[0].mxu0 %v1433
        %v1598 = vpop.f32.mrb[0].mxu0
        %v1599 = vadd.f32 0.0, %v1598
        %v1600 = vpop.f32.mrb[0].mxu0
        %v1601 = vpop.f32.mrb[0].mxu0
        %v1602 = vadd.f32 0.0, %v1601
        %v1603 = vpop.f32.mrb[0].mxu0
        %1604 = vmatprep.mubr.bf16.mxu0 0
        %1605 = vmatmul.mubr.bf16.gmra.mrb[0].mxu0 %v1434
        %v1606 = vpop.f32.mrb[0].mxu0
        %v1607 = vadd.f32 0.0, %v1606
        %v1608 = vpop.f32.mrb[0].mxu0
        %v1609 = vpop.f32.mrb[0].mxu0
        %v1610 = vadd.f32 0.0, %v1609
        %v1611 = vpop.f32.mrb[0].mxu0
        %1612 = vmatprep.mubr.bf16.mxu0 0
        %1613 = vmatmul.mubr.bf16.gmra.mrb[0].mxu0 %v1435
        %v1614 = vpop.f32.mrb[0].mxu0
        %v1615 = vadd.f32 0.0, %v1614
        %v1616 = vpop.f32.mrb[0].mxu0
        %v1617 = vpop.f32.mrb[0].mxu0
        %v1618 = vadd.f32 0.0, %v1617
        %v1619 = vpop.f32.mrb[0].mxu0
        %1620 = vmatprep.mubr.bf16.mxu0 0
        %1621 = vmatmul.mubr.bf16.gmra.mrb[0].mxu0 %v1436
        %v1622 = vpop.f32.mrb[0].mxu0
        %v1623 = vadd.f32 0.0, %v1622
        %v1624 = vpop.f32.mrb[0].mxu0
        %v1625 = vpop.f32.mrb[0].mxu0
        %v1626 = vadd.f32 0.0, %v1625
        %v1627 = vpop.f32.mrb[0].mxu0
        %1628 = vmatprep.mubr.bf16.mxu0 0
        %1629 = vmatmul.mubr.bf16.gmra.mrb[0].mxu0 %v1437
        %v1630 = vpop.f32.mrb[0].mxu0
        %v1631 = vadd.f32 0.0, %v1630
        %v1632 = vpop.f32.mrb[0].mxu0
        %v1633 = vpop.f32.mrb[0].mxu0
        %v1634 = vadd.f32 0.0, %v1633
        %v1635 = vpop.f32.mrb[0].mxu0
        %1636 = vmatprep.mubr.bf16.mxu0 0
        %1637 = vmatmul.mubr.bf16.gmra.mrb[0].mxu0 %v1438
        %v1638 = vpop.f32.mrb[0].mxu0
        %v1639 = vadd.f32 0.0, %v1638
        %v1640 = vpop.f32.mrb[0].mxu0
        %v1641 = vpop.f32.mrb[0].mxu0
        %v1642 = vadd.f32 0.0, %v1641
        %v1643 = vpop.f32.mrb[0].mxu0
        %1644 = vmatprep.mubr.bf16.mxu0 0
        %1645 = vmatmul.mubr.bf16.gmra.mrb[0].mxu0 %v1439
        %v1646 = vpop.f32.mrb[0].mxu0
        %v1647 = vadd.f32 0.0, %v1646
        %v1648 = vpop.f32.mrb[0].mxu0
        %v1649 = vpop.f32.mrb[0].mxu0
        %v1650 = vadd.f32 0.0, %v1649
        %v1651 = vpop.f32.mrb[0].mxu0
        %1652 = vdwg.mxu0
        %v1653 = vpack.c.bf16 %v1498, %v1495
        %v1654 = vpack.c.bf16 %v1506, %v1503
        %v1655 = vpack.c.bf16 %v1514, %v1511
        %v1656 = vpack.c.bf16 %v1522, %v1519
        %v1657 = vpack.c.bf16 %v1530, %v1527
        %v1658 = vpack.c.bf16 %v1538, %v1535
        %v1659 = vpack.c.bf16 %v1546, %v1543
        %v1660 = vpack.c.bf16 %v1554, %v1551
        %v1661 = vpack.c.bf16 %v1562, %v1559
        %v1662 = vpack.c.bf16 %v1570, %v1567
        %v1663 = vpack.c.bf16 %v1578, %v1575
        %v1664 = vpack.c.bf16 %v1586, %v1583
        %v1665 = vpack.c.bf16 %v1594, %v1591
        %v1666 = vpack.c.bf16 %v1602, %v1599
        %v1667 = vpack.c.bf16 %v1610, %v1607
        %v1668 = vpack.c.bf16 %v1618, %v1615
        %v1669 = vpack.c.bf16 %v1626, %v1623
        %v1670 = vpack.c.bf16 %v1634, %v1631
        %v1671 = vpack.c.bf16 %v1642, %v1639
        %v1672 = vpack.c.bf16 %v1650, %v1647
        %v1673 = vpack.c.b16 %v1373, %v1372
        %v1674 = vpack.c.b16 %v1375, %v1374
        %v1675 = vpack.c.b16 %v1377, %v1376
        %v1676 = vpack.c.b16 %v1379, %v1378
        %v1677 = vpack.c.b16 %v1381, %v1380
        %v1678 = vpack.c.b16 %v1383, %v1382
        %v1679 = vpack.c.b16 %v1385, %v1384
        %v1680 = vpack.c.b16 %v1387, %v1386
        %v1681 = vpack.c.b16 %v1389, %v1388
        %v1682 = vpack.c.b16 %v1391, %v1390
        %v1683 = vpack.c.b16 %v1393, %v1392
        %v1684 = vpack.c.b16 %v1395, %v1394
        %v1685 = vpack.c.b16 %v1397, %v1396
        %v1686 = vpack.c.b16 %v1399, %v1398
        %v1687 = vpack.c.b16 %v1401, %v1400
        %v1688 = vpack.c.b16 %v1403, %v1402
        %v1689 = vpack.c.b16 %v1405, %v1404
        %v1690 = vpack.c.b16 %v1407, %v1406
        %v1691 = vpack.c.b16 %v1409, %v1408
        %v1692 = vpack.c.b16 %v1411, %v1410
        %1713 = vxpose.xlu0.c.b16.start [1/8] %v1673, 128
        %1714 = vxpose.xlu0.c.b16.cont [2/8] %v1674, 128
        %1715 = vxpose.xlu0.c.b16.cont [3/8] %v1675, 128
        %1716 = vxpose.xlu0.c.b16.cont [4/8] %v1676, 128
        %1717 = vxpose.xlu0.c.b16.cont [5/8] %v1677, 128
        %1718 = vxpose.xlu0.c.b16.cont [6/8] %v1678, 128
        %1719 = vxpose.xlu0.c.b16.cont [7/8] %v1679, 128
        %1720 = vxpose.xlu0.c.b16.end [8/8] %v1680, 128
        %v1721 = vpop.trf.xlu0
        %v1722 = vpop.trf.xlu0
        %v1723 = vpop.trf.xlu0
        %v1724 = vpop.trf.xlu0
        %v1725 = vpop.trf.xlu0
        %v1726 = vpop.trf.xlu0
        %v1727 = vpop.trf.xlu0
        %v1728 = vpop.trf.xlu0
        %1729 = vxpose.xlu0.c.b16.start [1/8] %v1681, 128
        %1730 = vxpose.xlu0.c.b16.cont [2/8] %v1682, 128
        %1731 = vxpose.xlu0.c.b16.cont [3/8] %v1683, 128
        %1732 = vxpose.xlu0.c.b16.cont [4/8] %v1684, 128
        %1733 = vxpose.xlu0.c.b16.cont [5/8] %v1685, 128
        %1734 = vxpose.xlu0.c.b16.cont [6/8] %v1686, 128
        %1735 = vxpose.xlu0.c.b16.cont [7/8] %v1687, 128
        %1736 = vxpose.xlu0.c.b16.end [8/8] %v1688, 128
        %v1737 = vpop.trf.xlu0
        %v1738 = vpop.trf.xlu0
        %v1739 = vpop.trf.xlu0
        %v1740 = vpop.trf.xlu0
        %v1741 = vpop.trf.xlu0
        %v1742 = vpop.trf.xlu0
        %v1743 = vpop.trf.xlu0
        %v1744 = vpop.trf.xlu0
        %1745 = vxpose.xlu0.c.b16.start [1/8] %v1689, 128
        %1746 = vxpose.xlu0.c.b16.cont [2/8] %v1690, 128
        %1747 = vxpose.xlu0.c.b16.cont [3/8] %v1691, 128
        %1748 = vxpose.xlu0.c.b16.cont [4/8] %v1692, 128
        %1749 = vxpose.xlu0.c.b16.cont [5/8] 0, 128
        %1750 = vxpose.xlu0.c.b16.cont [6/8] 0, 128
        %1751 = vxpose.xlu0.c.b16.cont [7/8] 0, 128
        %1752 = vxpose.xlu0.c.b16.end [8/8] 0, 128
        %v1753 = vpop.trf.xlu0
        %v1754 = vpop.trf.xlu0
        %v1755 = vpop.trf.xlu0
        %v1756 = vpop.trf.xlu0
        %v1757 = vpop.trf.xlu0
        %v1758 = vpop.trf.xlu0
        %v1759 = vpop.trf.xlu0
        %v1760 = vpop.trf.xlu0
        %vm1761 = vcmask 523264
        %v1763 = vsel %vm1761, %v1753, 0
        %v1766 = vsel %vm1761, %v1754, 0
        %v1769 = vsel %vm1761, %v1755, 0
        %v1772 = vsel %vm1761, %v1756, 0
        %v1775 = vsel %vm1761, %v1757, 0
        %v1778 = vsel %vm1761, %v1758, 0
        %v1781 = vsel %vm1761, %v1759, 0
        %v1784 = vsel %vm1761, %v1760, 0
        %1786 = vmatprep.subr.bf16.mxu0 0
        %1787 = vmatpush1.bf16.msra.mxu0 %v1653
        %1788 = vmatprep.subr.bf16.mxu0 0
        %1789 = vmatpush1.bf16.msra.mxu0 %v1654
        %1790 = vmatprep.subr.bf16.mxu0 0
        %1791 = vmatpush1.bf16.msra.mxu0 %v1655
        %1792 = vmatprep.subr.bf16.mxu0 0
        %1793 = vmatpush1.bf16.msra.mxu0 %v1656
        %1794 = vmatprep.subr.bf16.mxu0 0
        %1795 = vmatpush1.bf16.msra.mxu0 %v1657
        %1796 = vmatprep.subr.bf16.mxu0 0
        %1797 = vmatpush1.bf16.msra.mxu0 %v1658
        %1798 = vmatprep.subr.bf16.mxu0 0
        %1799 = vmatpush1.bf16.msra.mxu0 %v1659
        %1800 = vmatprep.subr.bf16.mxu0 0
        %1801 = vmatpush1.bf16.msra.mxu0 %v1660
        %1802 = vmatprep.subr.bf16.mxu0 0
        %1803 = vmatpush1.bf16.msra.mxu0 %v1661
        %1804 = vmatprep.subr.bf16.mxu0 0
        %1805 = vmatpush1.bf16.msra.mxu0 %v1662
        %1806 = vmatprep.subr.bf16.mxu0 0
        %1807 = vmatpush1.bf16.msra.mxu0 %v1663
        %1808 = vmatprep.subr.bf16.mxu0 0
        %1809 = vmatpush1.bf16.msra.mxu0 %v1664
        %1810 = vmatprep.subr.bf16.mxu0 0
        %1811 = vmatpush1.bf16.msra.mxu0 %v1665
        %1812 = vmatprep.subr.bf16.mxu0 0
        %1813 = vmatpush1.bf16.msra.mxu0 %v1666
        %1814 = vmatprep.subr.bf16.mxu0 0
        %1815 = vmatpush1.bf16.msra.mxu0 %v1667
        %1816 = vmatprep.subr.bf16.mxu0 0
        %1817 = vmatpush1.bf16.msra.mxu0 %v1668
        %1818 = vmatprep.mubr.bf16.mxu0 %v1737
        %1819 = vmatmul.mubr.bf16.gmra.mrb[0].mxu0 %v1721
        %v1820 = vpop.f32.mrb[0].mxu0
        %v1821 = vadd.f32 0.0, %v1820
        %v1822 = vpop.f32.mrb[0].mxu0
        %v1823 = vpop.f32.mrb[0].mxu0
        %v1824 = vadd.f32 0.0, %v1823
        %v1825 = vpop.f32.mrb[0].mxu0
        %1826 = vmatprep.mubr.bf16.mxu0 %v1738
        %1827 = vmatmul.mubr.bf16.gmra.mrb[0].mxu0 %v1722
        %v1828 = vpop.f32.mrb[0].mxu0
        %v1829 = vadd.f32 0.0, %v1828
        %v1830 = vpop.f32.mrb[0].mxu0
        %v1831 = vpop.f32.mrb[0].mxu0
        %v1832 = vadd.f32 0.0, %v1831
        %v1833 = vpop.f32.mrb[0].mxu0
        %1834 = vmatprep.mubr.bf16.mxu0 %v1739
        %1835 = vmatmul.mubr.bf16.gmra.mrb[0].mxu0 %v1723
        %v1836 = vpop.f32.mrb[0].mxu0
        %v1837 = vadd.f32 0.0, %v1836
        %v1838 = vpop.f32.mrb[0].mxu0
        %v1839 = vpop.f32.mrb[0].mxu0
        %v1840 = vadd.f32 0.0, %v1839
        %v1841 = vpop.f32.mrb[0].mxu0
        %1842 = vmatprep.mubr.bf16.mxu0 %v1740
        %1843 = vmatmul.mubr.bf16.gmra.mrb[0].mxu0 %v1724
        %v1844 = vpop.f32.mrb[0].mxu0
        %v1845 = vadd.f32 0.0, %v1844
        %v1846 = vpop.f32.mrb[0].mxu0
        %v1847 = vpop.f32.mrb[0].mxu0
        %v1848 = vadd.f32 0.0, %v1847
        %v1849 = vpop.f32.mrb[0].mxu0
        %1850 = vmatprep.mubr.bf16.mxu0 %v1741
        %1851 = vmatmul.mubr.bf16.gmra.mrb[0].mxu0 %v1725
        %v1852 = vpop.f32.mrb[0].mxu0
        %v1853 = vadd.f32 0.0, %v1852
        %v1854 = vpop.f32.mrb[0].mxu0
        %v1855 = vpop.f32.mrb[0].mxu0
        %v1856 = vadd.f32 0.0, %v1855
        %v1857 = vpop.f32.mrb[0].mxu0
        %1858 = vmatprep.mubr.bf16.mxu0 %v1742
        %1859 = vmatmul.mubr.bf16.gmra.mrb[0].mxu0 %v1726
        %v1860 = vpop.f32.mrb[0].mxu0
        %v1861 = vadd.f32 0.0, %v1860
        %v1862 = vpop.f32.mrb[0].mxu0
        %v1863 = vpop.f32.mrb[0].mxu0
        %v1864 = vadd.f32 0.0, %v1863
        %v1865 = vpop.f32.mrb[0].mxu0
        %1866 = vmatprep.mubr.bf16.mxu0 %v1743
        %1867 = vmatmul.mubr.bf16.gmra.mrb[0].mxu0 %v1727
        %v1868 = vpop.f32.mrb[0].mxu0
        %v1869 = vadd.f32 0.0, %v1868
        %v1870 = vpop.f32.mrb[0].mxu0
        %v1871 = vpop.f32.mrb[0].mxu0
        %v1872 = vadd.f32 0.0, %v1871
        %v1873 = vpop.f32.mrb[0].mxu0
        %1874 = vmatprep.mubr.bf16.mxu0 %v1744
        %1875 = vmatmul.mubr.bf16.gmra.mrb[0].mxu0 %v1728
        %v1876 = vpop.f32.mrb[0].mxu0
        %v1877 = vadd.f32 0.0, %v1876
        %v1878 = vpop.f32.mrb[0].mxu0
        %v1879 = vpop.f32.mrb[0].mxu0
        %v1880 = vadd.f32 0.0, %v1879
        %v1881 = vpop.f32.mrb[0].mxu0
        %1882 = vdwg.mxu0
        %1883 = vmatprep.subr.bf16.mxu0 0
        %1884 = vmatpush1.bf16.msra.mxu0 %v1669
        %1885 = vmatprep.subr.bf16.mxu0 0
        %1886 = vmatpush1.bf16.msra.mxu0 %v1670
        %1887 = vmatprep.subr.bf16.mxu0 0
        %1888 = vmatpush1.bf16.msra.mxu0 %v1671
        %1889 = vmatprep.subr.bf16.mxu0 0
        %1890 = vmatpush1.bf16.msra.mxu0 %v1672
        %1891 = vmatprep.subr.bf16.mxu0 0
        %1892 = vmatpush1.bf16.msra.mxu0 0
        %1893 = vmatprep.subr.bf16.mxu0 0
        %1894 = vmatpush1.bf16.msra.mxu0 0
        %1895 = vmatprep.subr.bf16.mxu0 0
        %1896 = vmatpush1.bf16.msra.mxu0 0
        %1897 = vmatprep.subr.bf16.mxu0 0
        %1898 = vmatpush1.bf16.msra.mxu0 0
        %1899 = vmatprep.subr.bf16.mxu0 0
        %1900 = vmatpush1.bf16.msra.mxu0 0
        %1901 = vmatprep.subr.bf16.mxu0 0
        %1902 = vmatpush1.bf16.msra.mxu0 0
        %1903 = vmatprep.subr.bf16.mxu0 0
        %1904 = vmatpush1.bf16.msra.mxu0 0
        %1905 = vmatprep.subr.bf16.mxu0 0
        %1906 = vmatpush1.bf16.msra.mxu0 0
        %1907 = vmatprep.subr.bf16.mxu0 0
        %1908 = vmatpush1.bf16.msra.mxu0 0
        %1909 = vmatprep.subr.bf16.mxu0 0
        %1910 = vmatpush1.bf16.msra.mxu0 0
        %1911 = vmatprep.subr.bf16.mxu0 0
        %1912 = vmatpush1.bf16.msra.mxu0 0
        %1913 = vmatprep.subr.bf16.mxu0 0
        %1914 = vmatpush1.bf16.msra.mxu0 0
        %1915 = vmatprep.mubr.bf16.mxu0 0
        %1916 = vmatmul.mubr.bf16.gmra.mrb[0].mxu0 %v1763
        %v1917 = vpop.f32.mrb[0].mxu0
        %v1918 = vadd.f32 %v1821, %v1917
        %v1919 = vpop.f32.mrb[0].mxu0
        %v1920 = vpop.f32.mrb[0].mxu0
        %v1921 = vadd.f32 %v1824, %v1920
        %v1922 = vpop.f32.mrb[0].mxu0
        %1923 = vmatprep.mubr.bf16.mxu0 0
        %1924 = vmatmul.mubr.bf16.gmra.mrb[0].mxu0 %v1766
        %v1925 = vpop.f32.mrb[0].mxu0
        %v1926 = vadd.f32 %v1829, %v1925
        %v1927 = vpop.f32.mrb[0].mxu0
        %v1928 = vpop.f32.mrb[0].mxu0
        %v1929 = vadd.f32 %v1832, %v1928
        %v1930 = vpop.f32.mrb[0].mxu0
        %1931 = vmatprep.mubr.bf16.mxu0 0
        %1932 = vmatmul.mubr.bf16.gmra.mrb[0].mxu0 %v1769
        %v1933 = vpop.f32.mrb[0].mxu0
        %v1934 = vadd.f32 %v1837, %v1933
        %v1935 = vpop.f32.mrb[0].mxu0
        %v1936 = vpop.f32.mrb[0].mxu0
        %v1937 = vadd.f32 %v1840, %v1936
        %v1938 = vpop.f32.mrb[0].mxu0
        %1939 = vmatprep.mubr.bf16.mxu0 0
        %1940 = vmatmul.mubr.bf16.gmra.mrb[0].mxu0 %v1772
        %v1941 = vpop.f32.mrb[0].mxu0
        %v1942 = vadd.f32 %v1845, %v1941
        %v1943 = vpop.f32.mrb[0].mxu0
        %v1944 = vpop.f32.mrb[0].mxu0
        %v1945 = vadd.f32 %v1848, %v1944
        %v1946 = vpop.f32.mrb[0].mxu0
        %1947 = vmatprep.mubr.bf16.mxu0 0
        %1948 = vmatmul.mubr.bf16.gmra.mrb[0].mxu0 %v1775
        %v1949 = vpop.f32.mrb[0].mxu0
        %v1950 = vadd.f32 %v1853, %v1949
        %v1951 = vpop.f32.mrb[0].mxu0
        %v1952 = vpop.f32.mrb[0].mxu0
        %v1953 = vadd.f32 %v1856, %v1952
        %v1954 = vpop.f32.mrb[0].mxu0
        %1955 = vmatprep.mubr.bf16.mxu0 0
        %1956 = vmatmul.mubr.bf16.gmra.mrb[0].mxu0 %v1778
        %v1957 = vpop.f32.mrb[0].mxu0
        %v1958 = vadd.f32 %v1861, %v1957
        %v1959 = vpop.f32.mrb[0].mxu0
        %v1960 = vpop.f32.mrb[0].mxu0
        %v1961 = vadd.f32 %v1864, %v1960
        %v1962 = vpop.f32.mrb[0].mxu0
        %1963 = vmatprep.mubr.bf16.mxu0 0
        %1964 = vmatmul.mubr.bf16.gmra.mrb[0].mxu0 %v1781
        %v1965 = vpop.f32.mrb[0].mxu0
        %v1966 = vadd.f32 %v1869, %v1965
        %v1967 = vpop.f32.mrb[0].mxu0
        %v1968 = vpop.f32.mrb[0].mxu0
        %v1969 = vadd.f32 %v1872, %v1968
        %v1970 = vpop.f32.mrb[0].mxu0
        %1971 = vmatprep.mubr.bf16.mxu0 0
        %1972 = vmatmul.mubr.bf16.gmra.mrb[0].mxu0 %v1784
        %v1973 = vpop.f32.mrb[0].mxu0
        %v1974 = vadd.f32 %v1877, %v1973
        %v1975 = vpop.f32.mrb[0].mxu0
        %v1976 = vpop.f32.mrb[0].mxu0
        %v1977 = vadd.f32 %v1880, %v1976
        %v1978 = vpop.f32.mrb[0].mxu0
        %1979 = vdwg.mxu0
        %1996 = vrot.lane.b32.xlu0 %v663, 8
        %v1997 = vpop.permute.xlu0 %1996
        %1998 = vrot.lane.b32.xlu0 %v664, 8
        %v1999 = vpop.permute.xlu0 %1998
        %2000 = vrot.lane.b32.xlu0 %v665, 8
        %v2001 = vpop.permute.xlu0 %2000
        %2002 = vrot.lane.b32.xlu0 %v666, 8
        %v2003 = vpop.permute.xlu0 %2002
        %2004 = vrot.lane.b32.xlu0 %v667, 8
        %v2005 = vpop.permute.xlu0 %2004
        %2006 = vrot.lane.b32.xlu0 %v668, 8
        %v2007 = vpop.permute.xlu0 %2006
        %2008 = vrot.lane.b32.xlu0 %v669, 8
        %v2009 = vpop.permute.xlu0 %2008
        %2010 = vrot.lane.b32.xlu0 %v670, 8
        %v2011 = vpop.permute.xlu0 %2010
        %2012 = vrot.lane.b32.xlu0 %v671, 8
        %v2013 = vpop.permute.xlu0 %2012
        %2014 = vrot.lane.b32.xlu0 %v672, 8
        %v2015 = vpop.permute.xlu0 %2014
        %2016 = vrot.lane.b32.xlu0 %v673, 8
        %v2017 = vpop.permute.xlu0 %2016
        %2018 = vrot.lane.b32.xlu0 %v674, 8
        %v2019 = vpop.permute.xlu0 %2018
        %2020 = vrot.lane.b32.xlu0 %v675, 8
        %v2021 = vpop.permute.xlu0 %2020
        %2022 = vrot.lane.b32.xlu0 %v676, 8
        %v2023 = vpop.permute.xlu0 %2022
        %2024 = vrot.lane.b32.xlu0 %v677, 8
        %v2025 = vpop.permute.xlu0 %2024
        %2026 = vrot.lane.b32.xlu0 %v678, 8
        %v2027 = vpop.permute.xlu0 %2026
        %v2044 = vsel %vm294, %v1918, %v1997
        %v2045 = vsel %vm294, %v1921, %v1999
        %v2046 = vsel %vm294, %v1926, %v2001
        %v2047 = vsel %vm294, %v1929, %v2003
        %v2048 = vsel %vm294, %v1934, %v2005
        %v2049 = vsel %vm294, %v1937, %v2007
        %v2050 = vsel %vm294, %v1942, %v2009
        %v2051 = vsel %vm294, %v1945, %v2011
        %v2052 = vsel %vm294, %v1950, %v2013
        %v2053 = vsel %vm294, %v1953, %v2015
        %v2054 = vsel %vm294, %v1958, %v2017
        %v2055 = vsel %vm294, %v1961, %v2019
        %v2056 = vsel %vm294, %v1966, %v2021
        %v2057 = vsel %vm294, %v1969, %v2023
        %v2058 = vsel %vm294, %v1974, %v2025
        %v2059 = vsel %vm294, %v1977, %v2027
        %v2060 = vld [vmem:[%s3] sm:$0xff]
        %v2061 = vld [vmem:[%s3 + $0x8] sm:$0xff]
        %v2062 = vld [vmem:[%s4] sm:$0x1]
        %v2064 = vlaneseq
        %v2065 = vshrl.u32 %v2064, 7
        %v2066 = vsub.s32 0, %v2065
        %v2067 = vrot.slane %v2062, %v2066
        %vm2069 = vcmask 130048
        %v2071 = vsel %vm2069, %v2044, 0
        %v2074 = vsel %vm2069, %v2045, 0
        %v2077 = vsel %vm2069, %v2046, 0
        %v2080 = vsel %vm2069, %v2047, 0
        %v2083 = vsel %vm2069, %v2048, 0
        %v2086 = vsel %vm2069, %v2049, 0
        %v2089 = vsel %vm2069, %v2050, 0
        %v2092 = vsel %vm2069, %v2051, 0
        %v2095 = vsel %vm2069, %v2052, 0
        %v2098 = vsel %vm2069, %v2053, 0
        %v2101 = vsel %vm2069, %v2054, 0
        %v2104 = vsel %vm2069, %v2055, 0
        %v2107 = vsel %vm2069, %v2056, 0
        %v2110 = vsel %vm2069, %v2057, 0
        %v2113 = vsel %vm2069, %v2058, 0
        %v2116 = vsel %vm2069, %v2059, 0
        %2118 = vmatprep.subr.mxu0 0.0
        %2119 = vmatpush1.msra.mxu0 %v2060
        %2120 = vmatprep.subr.mxu0 0.0
        %2121 = vmatpush1.msra.mxu0 %v2061
        %2122 = vmatprep.subr.mxu0 0.0
        %2123 = vmatpush1.msra.mxu0 0.0
        %2124 = vmatprep.subr.mxu0 0.0
        %2125 = vmatpush1.msra.mxu0 0.0
        %2126 = vmatprep.subr.mxu0 0.0
        %2127 = vmatpush1.msra.mxu0 0.0
        %2128 = vmatprep.subr.mxu0 0.0
        %2129 = vmatpush1.msra.mxu0 0.0
        %2130 = vmatprep.subr.mxu0 0.0
        %2131 = vmatpush1.msra.mxu0 0.0
        %2132 = vmatprep.subr.mxu0 0.0
        %2133 = vmatpush1.msra.mxu0 0.0
        %2134 = vmatprep.subr.mxu0 0.0
        %2135 = vmatpush1.msra.mxu0 0.0
        %2136 = vmatprep.subr.mxu0 0.0
        %2137 = vmatpush1.msra.mxu0 0.0
        %2138 = vmatprep.subr.mxu0 0.0
        %2139 = vmatpush1.msra.mxu0 0.0
        %2140 = vmatprep.subr.mxu0 0.0
        %2141 = vmatpush1.msra.mxu0 0.0
        %2142 = vmatprep.subr.mxu0 0.0
        %2143 = vmatpush1.msra.mxu0 0.0
        %2144 = vmatprep.subr.mxu0 0.0
        %2145 = vmatpush1.msra.mxu0 0.0
        %2146 = vmatprep.subr.mxu0 0.0
        %2147 = vmatpush1.msra.mxu0 0.0
        %2148 = vmatprep.subr.mxu0 0.0
        %2149 = vmatpush1.msra.mxu0 0.0
        %2150 = vmatprep.subr.mxu0 0.0
        %2151 = vmatpush1.msra.mxu0 0.0
        %2152 = vmatprep.subr.mxu0 0.0
        %2153 = vmatpush1.msra.mxu0 0.0
        %2154 = vmatprep.subr.mxu0 0.0
        %2155 = vmatpush1.msra.mxu0 0.0
        %2156 = vmatprep.subr.mxu0 0.0
        %2157 = vmatpush1.msra.mxu0 0.0
        %2158 = vmatprep.subr.mxu0 0.0
        %2159 = vmatpush1.msra.mxu0 0.0
        %2160 = vmatprep.subr.mxu0 0.0
        %2161 = vmatpush1.msra.mxu0 0.0
        %2162 = vmatprep.subr.mxu0 0.0
        %2163 = vmatpush1.msra.mxu0 0.0
        %2164 = vmatprep.subr.mxu0 0.0
        %2165 = vmatpush1.msra.mxu0 0.0
        %2166 = vmatprep.subr.mxu0 0.0
        %2167 = vmatpush1.msra.mxu0 0.0
        %2168 = vmatprep.subr.mxu0 0.0
        %2169 = vmatpush1.msra.mxu0 0.0
        %2170 = vmatprep.subr.mxu0 0.0
        %2171 = vmatpush1.msra.mxu0 0.0
        %2172 = vmatprep.subr.mxu0 0.0
        %2173 = vmatpush1.msra.mxu0 0.0
        %2174 = vmatprep.subr.mxu0 0.0
        %2175 = vmatpush1.msra.mxu0 0.0
        %2176 = vmatprep.subr.mxu0 0.0
        %2177 = vmatpush1.msra.mxu0 0.0
        %2178 = vmatprep.subr.mxu0 0.0
        %2179 = vmatpush1.msra.mxu0 0.0
        %2180 = vmatprep.subr.mxu0 0.0
        %2181 = vmatpush1.msra.mxu0 0.0
        %2182 = vmatprep.mubr.f32.mxu0 0.0
        %2183 = vmatmul.mubr.f32.gmra.mrb[0].mxu0 %v2071
        %v2184 = vpop.f32.mrb[0].mxu0
        %v2185 = vadd.f32 %v2067, %v2184
        %v2186 = vpop.f32.mrb[0].mxu0
        %2187 = vmatprep.mubr.f32.mxu0 0.0
        %2188 = vmatmul.mubr.f32.gmra.mrb[0].mxu0 %v2074
        %v2189 = vpop.f32.mrb[0].mxu0
        %v2190 = vadd.f32 %v2067, %v2189
        %v2191 = vpop.f32.mrb[0].mxu0
        %2192 = vmatprep.mubr.f32.mxu0 0.0
        %2193 = vmatmul.mubr.f32.gmra.mrb[0].mxu0 %v2077
        %v2194 = vpop.f32.mrb[0].mxu0
        %v2195 = vadd.f32 %v2067, %v2194
        %v2196 = vpop.f32.mrb[0].mxu0
        %2197 = vmatprep.mubr.f32.mxu0 0.0
        %2198 = vmatmul.mubr.f32.gmra.mrb[0].mxu0 %v2080
        %v2199 = vpop.f32.mrb[0].mxu0
        %v2200 = vadd.f32 %v2067, %v2199
        %v2201 = vpop.f32.mrb[0].mxu0
        %2202 = vmatprep.mubr.f32.mxu0 0.0
        %2203 = vmatmul.mubr.f32.gmra.mrb[0].mxu0 %v2083
        %v2204 = vpop.f32.mrb[0].mxu0
        %v2205 = vadd.f32 %v2067, %v2204
        %v2206 = vpop.f32.mrb[0].mxu0
        %2207 = vmatprep.mubr.f32.mxu0 0.0
        %2208 = vmatmul.mubr.f32.gmra.mrb[0].mxu0 %v2086
        %v2209 = vpop.f32.mrb[0].mxu0
        %v2210 = vadd.f32 %v2067, %v2209
        %v2211 = vpop.f32.mrb[0].mxu0
        %2212 = vmatprep.mubr.f32.mxu0 0.0
        %2213 = vmatmul.mubr.f32.gmra.mrb[0].mxu0 %v2089
        %v2214 = vpop.f32.mrb[0].mxu0
        %v2215 = vadd.f32 %v2067, %v2214
        %v2216 = vpop.f32.mrb[0].mxu0
        %2217 = vmatprep.mubr.f32.mxu0 0.0
        %2218 = vmatmul.mubr.f32.gmra.mrb[0].mxu0 %v2092
        %v2219 = vpop.f32.mrb[0].mxu0
        %v2220 = vadd.f32 %v2067, %v2219
        %v2221 = vpop.f32.mrb[0].mxu0
        %2222 = vmatprep.mubr.f32.mxu0 0.0
        %2223 = vmatmul.mubr.f32.gmra.mrb[0].mxu0 %v2095
        %v2224 = vpop.f32.mrb[0].mxu0
        %v2225 = vadd.f32 %v2067, %v2224
        %v2226 = vpop.f32.mrb[0].mxu0
        %2227 = vmatprep.mubr.f32.mxu0 0.0
        %2228 = vmatmul.mubr.f32.gmra.mrb[0].mxu0 %v2098
        %v2229 = vpop.f32.mrb[0].mxu0
        %v2230 = vadd.f32 %v2067, %v2229
        %v2231 = vpop.f32.mrb[0].mxu0
        %2232 = vmatprep.mubr.f32.mxu0 0.0
        %2233 = vmatmul.mubr.f32.gmra.mrb[0].mxu0 %v2101
        %v2234 = vpop.f32.mrb[0].mxu0
        %v2235 = vadd.f32 %v2067, %v2234
        %v2236 = vpop.f32.mrb[0].mxu0
        %2237 = vmatprep.mubr.f32.mxu0 0.0
        %2238 = vmatmul.mubr.f32.gmra.mrb[0].mxu0 %v2104
        %v2239 = vpop.f32.mrb[0].mxu0
        %v2240 = vadd.f32 %v2067, %v2239
        %v2241 = vpop.f32.mrb[0].mxu0
        %2242 = vmatprep.mubr.f32.mxu0 0.0
        %2243 = vmatmul.mubr.f32.gmra.mrb[0].mxu0 %v2107
        %v2244 = vpop.f32.mrb[0].mxu0
        %v2245 = vadd.f32 %v2067, %v2244
        %v2246 = vpop.f32.mrb[0].mxu0
        %2247 = vmatprep.mubr.f32.mxu0 0.0
        %2248 = vmatmul.mubr.f32.gmra.mrb[0].mxu0 %v2110
        %v2249 = vpop.f32.mrb[0].mxu0
        %v2250 = vadd.f32 %v2067, %v2249
        %v2251 = vpop.f32.mrb[0].mxu0
        %2252 = vmatprep.mubr.f32.mxu0 0.0
        %2253 = vmatmul.mubr.f32.gmra.mrb[0].mxu0 %v2113
        %v2254 = vpop.f32.mrb[0].mxu0
        %v2255 = vadd.f32 %v2067, %v2254
        %v2256 = vpop.f32.mrb[0].mxu0
        %2257 = vmatprep.mubr.f32.mxu0 0.0
        %2258 = vmatmul.mubr.f32.gmra.mrb[0].mxu0 %v2116
        %v2259 = vpop.f32.mrb[0].mxu0
        %v2260 = vadd.f32 %v2067, %v2259
        %v2261 = vpop.f32.mrb[0].mxu0
        %2262 = vdwg.mxu0
        %vm2263 = vcmp.gt.f32.partialorder %v2185, 0.0
        %vm2264 = vcmp.gt.f32.partialorder %v2190, 0.0
        %vm2265 = vcmp.gt.f32.partialorder %v2195, 0.0
        %vm2266 = vcmp.gt.f32.partialorder %v2200, 0.0
        %vm2267 = vcmp.gt.f32.partialorder %v2205, 0.0
        %vm2268 = vcmp.gt.f32.partialorder %v2210, 0.0
        %vm2269 = vcmp.gt.f32.partialorder %v2215, 0.0
        %vm2270 = vcmp.gt.f32.partialorder %v2220, 0.0
        %vm2271 = vcmp.gt.f32.partialorder %v2225, 0.0
        %vm2272 = vcmp.gt.f32.partialorder %v2230, 0.0
        %vm2273 = vcmp.gt.f32.partialorder %v2235, 0.0
        %vm2274 = vcmp.gt.f32.partialorder %v2240, 0.0
        %vm2275 = vcmp.gt.f32.partialorder %v2245, 0.0
        %vm2276 = vcmp.gt.f32.partialorder %v2250, 0.0
        %vm2277 = vcmp.gt.f32.partialorder %v2255, 0.0
        %vm2278 = vcmp.gt.f32.partialorder %v2260, 0.0
        %v2279 = vmul.f32 %v2185, 0.01
        %v2280 = vmul.f32 %v2190, 0.01
        %v2281 = vmul.f32 %v2195, 0.01
        %v2282 = vmul.f32 %v2200, 0.01
        %v2283 = vmul.f32 %v2205, 0.01
        %v2284 = vmul.f32 %v2210, 0.01
        %v2285 = vmul.f32 %v2215, 0.01
        %v2286 = vmul.f32 %v2220, 0.01
        %v2287 = vmul.f32 %v2225, 0.01
        %v2288 = vmul.f32 %v2230, 0.01
        %v2289 = vmul.f32 %v2235, 0.01
        %v2290 = vmul.f32 %v2240, 0.01
        %v2291 = vmul.f32 %v2245, 0.01
        %v2292 = vmul.f32 %v2250, 0.01
        %v2293 = vmul.f32 %v2255, 0.01
        %v2294 = vmul.f32 %v2260, 0.01
        %v2295 = vsel %vm2263, %v2185, %v2279
        %v2296 = vsel %vm2264, %v2190, %v2280
        %v2297 = vsel %vm2265, %v2195, %v2281
        %v2298 = vsel %vm2266, %v2200, %v2282
        %v2299 = vsel %vm2267, %v2205, %v2283
        %v2300 = vsel %vm2268, %v2210, %v2284
        %v2301 = vsel %vm2269, %v2215, %v2285
        %v2302 = vsel %vm2270, %v2220, %v2286
        %v2303 = vsel %vm2271, %v2225, %v2287
        %v2304 = vsel %vm2272, %v2230, %v2288
        %v2305 = vsel %vm2273, %v2235, %v2289
        %v2306 = vsel %vm2274, %v2240, %v2290
        %v2307 = vsel %vm2275, %v2245, %v2291
        %v2308 = vsel %vm2276, %v2250, %v2292
        %v2309 = vsel %vm2277, %v2255, %v2293
        %v2310 = vsel %vm2278, %v2260, %v2294
        %v2311 = vmul.f32 %v2295, %v631
        %v2312 = vmul.f32 %v2296, %v632
        %v2313 = vmul.f32 %v2297, %v633
        %v2314 = vmul.f32 %v2298, %v634
        %v2315 = vmul.f32 %v2299, %v635
        %v2316 = vmul.f32 %v2300, %v636
        %v2317 = vmul.f32 %v2301, %v637
        %v2318 = vmul.f32 %v2302, %v638
        %v2319 = vmul.f32 %v2303, %v639
        %v2320 = vmul.f32 %v2304, %v640
        %v2321 = vmul.f32 %v2305, %v641
        %v2322 = vmul.f32 %v2306, %v642
        %v2323 = vmul.f32 %v2307, %v643
        %v2324 = vmul.f32 %v2308, %v644
        %v2325 = vmul.f32 %v2309, %v645
        %v2326 = vmul.f32 %v2310, %v646
        %2327 = vst [vmem:[%s238] sm:$0xff] %v2311
        %2328 = vst [vmem:[%s238 + $0x8] sm:$0xff] %v2312
        %2329 = vst [vmem:[%s238 + $0x10] sm:$0xff] %v2313
        %2330 = vst [vmem:[%s238 + $0x18] sm:$0xff] %v2314
        %2331 = vst [vmem:[%s238 + $0x20] sm:$0xff] %v2315
        %2332 = vst [vmem:[%s238 + $0x28] sm:$0xff] %v2316
        %2333 = vst [vmem:[%s238 + $0x30] sm:$0xff] %v2317
        %2334 = vst [vmem:[%s238 + $0x38] sm:$0xff] %v2318
        %2335 = vst [vmem:[%s238 + $0x40] sm:$0xff] %v2319
        %2336 = vst [vmem:[%s238 + $0x48] sm:$0xff] %v2320
        %2337 = vst [vmem:[%s238 + $0x50] sm:$0xff] %v2321
        %2338 = vst [vmem:[%s238 + $0x58] sm:$0xff] %v2322
        %2339 = vst [vmem:[%s238 + $0x60] sm:$0xff] %v2323
        %2340 = vst [vmem:[%s238 + $0x68] sm:$0xff] %v2324
        %2341 = vst [vmem:[%s238 + $0x70] sm:$0xff] %v2325
        %2342 = vst [vmem:[%s238 + $0x78] sm:$0xff] %v2326
        %2359 = vrot.lane.b32.xlu0 %v255, 120
        %v2360 = vpop.permute.xlu0 %2359
        %2361 = vrot.lane.b32.xlu0 %v256, 120
        %v2362 = vpop.permute.xlu0 %2361
        %2363 = vrot.lane.b32.xlu0 %v257, 120
        %v2364 = vpop.permute.xlu0 %2363
        %2365 = vrot.lane.b32.xlu0 %v258, 120
        %v2366 = vpop.permute.xlu0 %2365
        %2367 = vrot.lane.b32.xlu0 %v259, 120
        %v2368 = vpop.permute.xlu0 %2367
        %2369 = vrot.lane.b32.xlu0 %v260, 120
        %v2370 = vpop.permute.xlu0 %2369
        %2371 = vrot.lane.b32.xlu0 %v261, 120
        %v2372 = vpop.permute.xlu0 %2371
        %2373 = vrot.lane.b32.xlu0 %v262, 120
        %v2374 = vpop.permute.xlu0 %2373
        %2375 = vrot.lane.b32.xlu0 %v263, 120
        %v2376 = vpop.permute.xlu0 %2375
        %2377 = vrot.lane.b32.xlu0 %v264, 120
        %v2378 = vpop.permute.xlu0 %2377
        %2379 = vrot.lane.b32.xlu0 %v265, 120
        %v2380 = vpop.permute.xlu0 %2379
        %2381 = vrot.lane.b32.xlu0 %v266, 120
        %v2382 = vpop.permute.xlu0 %2381
        %2383 = vrot.lane.b32.xlu0 %v267, 120
        %v2384 = vpop.permute.xlu0 %2383
        %2385 = vrot.lane.b32.xlu0 %v268, 120
        %v2386 = vpop.permute.xlu0 %2385
        %2387 = vrot.lane.b32.xlu0 %v269, 120
        %v2388 = vpop.permute.xlu0 %2387
        %2389 = vrot.lane.b32.xlu0 %v270, 120
        %v2390 = vpop.permute.xlu0 %2389
        %vm2407 = vcmask 31744
        %2408 = vst.msk [vmem:[%s238] sm:$0xff] %vm2407, %v2360
        %2409 = vst.msk [vmem:[%s238 + $0x8] sm:$0xff] %vm2407, %v2362
        %2410 = vst.msk [vmem:[%s238 + $0x10] sm:$0xff] %vm2407, %v2364
        %2411 = vst.msk [vmem:[%s238 + $0x18] sm:$0xff] %vm2407, %v2366
        %2412 = vst.msk [vmem:[%s238 + $0x20] sm:$0xff] %vm2407, %v2368
        %2413 = vst.msk [vmem:[%s238 + $0x28] sm:$0xff] %vm2407, %v2370
        %2414 = vst.msk [vmem:[%s238 + $0x30] sm:$0xff] %vm2407, %v2372
        %2415 = vst.msk [vmem:[%s238 + $0x38] sm:$0xff] %vm2407, %v2374
        %2416 = vst.msk [vmem:[%s238 + $0x40] sm:$0xff] %vm2407, %v2376
        %2417 = vst.msk [vmem:[%s238 + $0x48] sm:$0xff] %vm2407, %v2378
        %2418 = vst.msk [vmem:[%s238 + $0x50] sm:$0xff] %vm2407, %v2380
        %2419 = vst.msk [vmem:[%s238 + $0x58] sm:$0xff] %vm2407, %v2382
        %2420 = vst.msk [vmem:[%s238 + $0x60] sm:$0xff] %vm2407, %v2384
        %2421 = vst.msk [vmem:[%s238 + $0x68] sm:$0xff] %vm2407, %v2386
        %2422 = vst.msk [vmem:[%s238 + $0x70] sm:$0xff] %vm2407, %v2388
        %2423 = vst.msk [vmem:[%s238 + $0x78] sm:$0xff] %vm2407, %v2390
        %s2424 = sand.u32 %s142, 1
        %s2425 = scalar_lea.sflag [#allocation3], %s2424
        %s2426 = sand.u32 %s142, 1
        %s2427 = smul.addr %s2426, 128
        %s2428 = scalar_lea.vmem [#allocation2], %s2427
        // Predicated region
        $region41: #{tpu_custom_call.1} parent=39 // pred_check
          %p2429 = pneg %p152
        $region42: #{tpu_custom_call.1} parent=39 // pred_check_branch
          %2431 = sbr.rel (%p2429) target = $region44
        $region43: #{tpu_custom_call.1} parent=39 // pred_region
          %s2432 = smul.u32 8, %s19
          %s2434 = ssub.s32 2048, 2048
          %2435 = vsyncadd %s2425, %s2434
          %s2436 = smul.addr %s2432, 2
          %s2437 = smul.addr %s2436, 128
          %s2438 = scalar_lea.hbm %s5, %s2437
          %s2439 = sshll.u32 %s2428, 4
          %s2440 = int_to_ptr.vmem [resolvable:$true] %s2439
          %2445 = dma.vmem_to_hbm [thread:$0]  %s2440, 2048, %s2438, %s2425, 128, 128, 8
        $region44: #{tpu_custom_call.1} parent=39 // pred_fallthru
          _
      $region40: #{tpu_custom_call.1} parent=5 // pred_fallthru
        _
      %p2446 = scmp.le.s32.totalorder 2, %s14
      // Predicated region
      $region45: #{tpu_custom_call.1} parent=5 // pred_check
        %p2447 = pneg %p2446
      $region46: #{tpu_custom_call.1} parent=5 // pred_check_branch
        %2449 = sbr.rel (%p2447) target = $region48
      $region47: #{tpu_custom_call.1} parent=5 // pred_region
        %s2450 = ssub.s32 %s14, 2
        // Predicated region
        $region49: #{tpu_custom_call.1} parent=47 // pred_check
          %p2451 = pneg %p158
        $region50: #{tpu_custom_call.1} parent=47 // pred_check_branch
          %2453 = sbr.rel (%p2451) target = $region52
        $region51: #{tpu_custom_call.1} parent=47 // pred_region
          %s2454 = sand.u32 %s143, 1
          %s2455 = scalar_lea.sflag [#allocation3], %s2454
          %s2456 = sand.u32 %s143, 1
          %s2457 = smul.addr %s2456, 128
          %s2458 = scalar_lea.vmem [#allocation2], %s2457
          %2459 = dma.done %s2455, 2048
        $region52: #{tpu_custom_call.1} parent=47 // pred_fallthru
          _
      $region48: #{tpu_custom_call.1} parent=5 // pred_fallthru
        _
    $region6: #{tpu_custom_call.1} parent=1 // loop_footer
      %s18 = sadd.s32 1, %s14
    $region7: #{tpu_custom_call.1} parent=1 // loop_footer_branch
      %13 = sbr.rel target = $region3
    $region8: #{tpu_custom_call.1} parent=1 // loop_exit
      _
    %2460 = vsyncpa [#allocation3], 1
    %s2461 = scalar_lea.sflag [#allocation3], 1
    %2462 = vsyncpa %s2461, 1

</llo_original>
